<compile_context>
chip_gen: v7x
topology: tpu7x:2x2x1
jax: 0.10.0
libtpu: 0.0.40
codegen_flags: <defaults>
</compile_context>

<pallas_src>
import jax
import jax.numpy as jnp
from jax.experimental import pallas as pl
from jax.experimental.pallas import tpu as pltpu

_LANE = 128      # lane width (last dim)
_PACK = 16       # bf16 sublane packing (second-to-last dim)
_TM_MAX = 1024   # max batch-tile rows


def _round_up(x: int, m: int) -> int:
    return ((x + m - 1) // m) * m


def _make_fcnn_kernel(num_layers: int, out_widths):
    """Kernel over one batch tile; whole MLP fused, weights VMEM-resident.

    refs = (x_tile, w_0, ..., w_L, b_all, out_tile)
      x_tile : (TM, in_pad)                f32 or bf16 (cast in-kernel)
      w_i    : (in_pad_i, out_pad_i)       bf16, zero-padded
      b_all  : (num_layers+1, max_out_pad) f32, zero-padded
      out    : (TM, out_pad_last)          f32
    """

    def kernel(*refs):
        x_ref = refs[0]
        w_refs = refs[1:1 + num_layers + 1]
        b_ref = refs[1 + num_layers + 1]
        out_ref = refs[-1]

        b_all = b_ref[...]                          # tiny, loaded once per batch tile
        h = x_ref[...].astype(jnp.bfloat16)         # cast in-kernel (no wrapper pass)
        for i in range(num_layers + 1):
            w = w_refs[i][...]                      # bf16 (in_pad, out_pad)
            n = out_widths[i]
            b = b_all[i:i + 1, :n]                  # (1, out_pad) f32, static slice
            acc = jnp.dot(h, w, preferred_element_type=jnp.float32) + b
            if i < num_layers:
                h = jnp.maximum(acc, 0.0).astype(jnp.bfloat16)
            else:
                out_ref[...] = acc.astype(out_ref.dtype)

    return kernel


def prepare_fcnn_params(params):
    """One-time prep: lane-pad weights/biases, cast matmul operands to bf16."""
    w_padded, out_widths = [], []
    for (w, b) in params:
        d_in, d_out = w.shape
        in_p, out_p = _round_up(d_in, _LANE), _round_up(d_out, _LANE)
        wp = jnp.zeros((in_p, out_p), jnp.bfloat16)
        wp = wp.at[:d_in, :d_out].set(w.astype(jnp.bfloat16))
        w_padded.append(wp)
        out_widths.append(out_p)

    max_out_p = max(out_widths)
    b_all = jnp.zeros((len(params), max_out_p), jnp.float32)
    for i, (_, b) in enumerate(params):
        b_all = b_all.at[i, :b.shape[-1]].set(b.reshape(-1).astype(jnp.float32))

    out_features = params[-1][0].shape[1]
    return tuple(w_padded), b_all, tuple(out_widths), out_features


def _pick_tm(batch: int, in_p: int) -> int:
    """Batch-tile rows: large (amortize per-step overhead), multiple of 16,
    padding waste < one sublane group, and >=2 grid steps when batch allows
    (keeps both v7x TensorCores busy)."""
    # Keep a double-buffered f32 x tile under ~32 MiB of VMEM.
    tm_cap = min(_TM_MAX, (32 << 20) // max(1, 8 * in_p))
    tm_cap = max(_PACK, (tm_cap // _PACK) * _PACK)
    n_tiles = pl.cdiv(batch, tm_cap)
    if batch >= 2 * _PACK:
        n_tiles = max(n_tiles, 2)
    return _round_up(pl.cdiv(batch, n_tiles), _PACK)


def fcnn_forward(x, prepared, num_layers: int):
    """x: (N, C, H, W) or (N, D). prepared = prepare_fcnn_params(params)."""
    w_padded, b_all, out_widths, out_features = prepared

    batch = x.shape[0]
    x2d = x.reshape(batch, -1)                  # same semantics as torch .view(N, -1)
    in_features = x2d.shape[1]
    in_p0 = w_padded[0].shape[0]
    out_p = out_widths[-1]
    max_out_p = max(out_widths)

    tm = _pick_tm(batch, in_p0)
    padded_batch = _round_up(batch, tm)
    grid = (padded_batch // tm,)

    # --- input staging: avoid any full extra pass over x when possible ----------
    if in_features == in_p0:
        x_in = x2d                              # stream f32 directly, cast in-kernel
        if padded_batch != batch:
            x_in = jnp.pad(x_in, ((0, padded_batch - batch), (0, 0)))
    else:
        # Fallback: lane-pad columns (extra pass unavoidable -> cast to bf16 here).
        x_in = jnp.zeros((padded_batch, in_p0), jnp.bfloat16)
        x_in = x_in.at[:batch, :in_features].set(x2d.astype(jnp.bfloat16))

    # --- per-chip VMEM budget ----------------------------------------------------
    try:
        vmem_cap = int(pltpu.get_tpu_info().vmem_capacity_bytes)
    except Exception:
        vmem_cap = 128 << 20
    xbytes = jnp.dtype(x_in.dtype).itemsize
    weight_bytes = sum(int(wp.size) * 2 for wp in w_padded)
    bias_bytes = int(b_all.size) * 4
    act_bytes = 2 * tm * max(in_p0, max_out_p) * 4            # inter-layer f32 activations
    io_bytes = 2 * tm * in_p0 * xbytes + 2 * tm * out_p * 4   # double-buffered x / out tiles
    needed = 2 * weight_bytes + bias_bytes + act_bytes + io_bytes
    vmem_limit = int(min(int(0.75 * vmem_cap), max(32 << 20, 2 * needed)))

    # TODO(synk): if the first-layer weight no longer fits VMEM-resident (esp. on
    # v7x's 64 MiB/core), add a K grid axis (last, "arbitrary") with a VMEM f32
    # accumulator and pl.when(k==0)/pl.when(k==last) init/finalize.

    kernel = _make_fcnn_kernel(num_layers, out_widths)

    def run(buffered_residents: bool):
        resident_kw = (
            dict(pipeline_mode=pl.Buffered(1)) if buffered_residents else {}
        )
        in_specs = [pl.BlockSpec((tm, in_p0), lambda i: (i, 0))]      # streamed x tiles
        for wp in w_padded:
            in_specs.append(pl.BlockSpec(wp.shape, lambda i: (0, 0), **resident_kw))
        in_specs.append(pl.BlockSpec(b_all.shape, lambda i: (0, 0), **resident_kw))
        return pl.pallas_call(
            kernel,
            out_shape=jax.ShapeDtypeStruct((padded_batch, out_p), jnp.float32),
            grid=grid,
            in_specs=in_specs,
            out_specs=pl.BlockSpec((tm, out_p), lambda i: (i, 0)),
            compiler_params=pltpu.CompilerParams(
                dimension_semantics=("parallel",),
                vmem_limit_bytes=vmem_limit,
            ),
        )(x_in, *w_padded, b_all)

    try:
        # Constant-index weights/biases: single-buffer (never re-fetched).
        out = run(True)
    except Exception:
        # Fallback if this jax build rejects Buffered(1) on resident blocks.
        out = run(False)

    return out[:batch, :out_features]


def init_fcnn_params(key, input_size, hidden_size, output_size, num_layers=1):
    """Deterministic init mirroring nn.Linear's U(-1/sqrt(fan_in), 1/sqrt(fan_in))."""
    dims = []
    d_in = input_size
    for _ in range(num_layers):
        dims.append((d_in, hidden_size))
        d_in = hidden_size
    dims.append((hidden_size, output_size))

    params = []
    for (fan_in, fan_out) in dims:
        key, kw, kb = jax.random.split(key, 3)
        bound = 1.0 / jnp.sqrt(jnp.float32(fan_in))
        w = jax.random.uniform(kw, (fan_in, fan_out), jnp.float32, -bound, bound)
        b = jax.random.uniform(kb, (1, fan_out), jnp.float32, -bound, bound)
        params.append((w, b))
    return params


def fcnn_reference(x, params):
    """Pure-JAX f32 reference for a sanity check."""
    h = x.reshape(x.shape[0], -1)
    for i, (w, b) in enumerate(params):
        h = h @ w + b
        if i < len(params) - 1:
            h = jnp.maximum(h, 0.0)
    return h


if __name__ == "__main__":
    key = jax.random.PRNGKey(0)
    kx, kp = jax.random.split(key)

    # Small shapes consistent with forward(): x is (N, C, H, W), flattened to (N, C*H*W).
    batch, C, H, W = 2, 4, 16, 16
    input_size = C * H * W          # 1024
    hidden_size = 32
    output_size = 16
    num_layers = 1

    x = jax.random.normal(kx, (batch, C, H, W), jnp.float32)
    params = init_fcnn_params(kp, input_size, hidden_size, output_size, num_layers)
    prepared = prepare_fcnn_params(params)   # pad/cast once, not per forward call

    y = fcnn_forward(x, prepared, num_layers)
    y = jax.block_until_ready(y)

    y_ref = fcnn_reference(x, params)
    assert y.shape == (batch, output_size)
    # bf16 matmul operands (f32 accumulation) -> loosen tolerance vs f32 reference.
    assert jnp.allclose(y, y_ref, atol=2e-2, rtol=2e-2), float(
        jnp.max(jnp.abs(y - y_ref)))

    print("KERNEL_OK")
</pallas_src>

<mosaic_0001>
module attributes {stable_mosaic.version = 11 : i64} {
  func.func @kernel(%arg0: i32, %arg1: memref<16x1024xf32, #tpu.memory_space<vmem>>, %arg2: memref<1024x128xbf16, #tpu.memory_space<vmem>>, %arg3: memref<128x128xbf16, #tpu.memory_space<vmem>>, %arg4: memref<2x128xf32, #tpu.memory_space<vmem>>, %arg5: memref<16x128xf32, #tpu.memory_space<vmem>>) attributes {dimension_semantics = [#tpu.dimension_semantics<parallel>], iteration_bounds = array<i64: 1>, scalar_prefetch = 0 : i64, scratch_operands = 0 : i64, tpu.core_type = #tpu.core_type<tc>, window_params = [{transform_indices = @transform_0, window_bounds = array<i64: 16, 1024>}, {pipeline_mode = #tpu.pipeline_mode<synchronous>, transform_indices = @transform_1, window_bounds = array<i64: 1024, 128>}, {pipeline_mode = #tpu.pipeline_mode<synchronous>, transform_indices = @transform_2, window_bounds = array<i64: 128, 128>}, {pipeline_mode = #tpu.pipeline_mode<synchronous>, transform_indices = @transform_3, window_bounds = array<i64: 2, 128>}, {transform_indices = @transform_4, window_bounds = array<i64: 16, 128>}]} {
    %c0 = arith.constant 0 : index
    %c0_0 = arith.constant 0 : index
    %0 = vector.load %arg4[%c0, %c0_0] : memref<2x128xf32, #tpu.memory_space<vmem>>, vector<2x128xf32>
    %c0_1 = arith.constant 0 : index
    %c0_2 = arith.constant 0 : index
    %1 = vector.load %arg1[%c0_1, %c0_2] : memref<16x1024xf32, #tpu.memory_space<vmem>>, vector<16x1024xf32>
    %2 = arith.truncf %1 : vector<16x1024xf32> to vector<16x1024xbf16>
    %c0_3 = arith.constant 0 : index
    %c0_4 = arith.constant 0 : index
    %3 = vector.load %arg2[%c0_3, %c0_4] : memref<1024x128xbf16, #tpu.memory_space<vmem>>, vector<1024x128xbf16>
    %4 = vector.extract_strided_slice %0 {offsets = [0, 0], sizes = [1, 128], strides = [1, 1]} : vector<2x128xf32> to vector<1x128xf32>
    %cst = arith.constant dense<0.000000e+00> : vector<16x128xf32>
    %5 = tpu.matmul %2, %3, %cst {dimension_numbers = #tpu.dot_dimension_numbers<[1], [0], [0], [1], [0, 0, 1, 1], [], []>} : vector<16x1024xbf16>, vector<1024x128xbf16>, vector<16x128xf32> -> vector<16x128xf32>
    %6 = vector.broadcast %4 : vector<1x128xf32> to vector<16x128xf32>
    %7 = arith.addf %5, %6 : vector<16x128xf32>
    %cst_5 = arith.constant 0.000000e+00 : f32
    %8 = vector.broadcast %cst_5 : f32 to vector<16x128xf32>
    %9 = arith.maximumf %7, %8 : vector<16x128xf32>
    %10 = arith.truncf %9 : vector<16x128xf32> to vector<16x128xbf16>
    %c0_6 = arith.constant 0 : index
    %c0_7 = arith.constant 0 : index
    %11 = vector.load %arg3[%c0_6, %c0_7] : memref<128x128xbf16, #tpu.memory_space<vmem>>, vector<128x128xbf16>
    %12 = vector.extract_strided_slice %0 {offsets = [1, 0], sizes = [1, 128], strides = [1, 1]} : vector<2x128xf32> to vector<1x128xf32>
    %cst_8 = arith.constant dense<0.000000e+00> : vector<16x128xf32>
    %13 = tpu.matmul %10, %11, %cst_8 {dimension_numbers = #tpu.dot_dimension_numbers<[1], [0], [0], [1], [0, 0, 1, 1], [], []>} : vector<16x128xbf16>, vector<128x128xbf16>, vector<16x128xf32> -> vector<16x128xf32>
    %14 = vector.broadcast %12 : vector<1x128xf32> to vector<16x128xf32>
    %15 = arith.addf %13, %14 : vector<16x128xf32>
    %c0_9 = arith.constant 0 : index
    %c0_10 = arith.constant 0 : index
    %16 = vector.load %arg5[%c0_9, %c0_10] : memref<16x128xf32, #tpu.memory_space<vmem>>, vector<16x128xf32>
    tpu.vector_store %arg5[%c0_9, %c0_10], %15 {strides = array<i32>} : memref<16x128xf32, #tpu.memory_space<vmem>>, vector<16x128xf32>,
    return
  }
  func.func @transform_0(%arg0: i32) -> (i32, i32) {
    %c0_i32 = arith.constant 0 : i32
    %c0_i32_0 = arith.constant 0 : i32
    return %arg0, %c0_i32 : i32, i32
  }
  func.func @transform_1(%arg0: i32) -> (i32, i32) {
    %c0_i32 = arith.constant 0 : i32
    %c0_i32_0 = arith.constant 0 : i32
    %c0_i32_1 = arith.constant 0 : i32
    return %c0_i32, %c0_i32_0 : i32, i32
  }
  func.func @transform_2(%arg0: i32) -> (i32, i32) {
    %c0_i32 = arith.constant 0 : i32
    %c0_i32_0 = arith.constant 0 : i32
    %c0_i32_1 = arith.constant 0 : i32
    return %c0_i32, %c0_i32_0 : i32, i32
  }
  func.func @transform_3(%arg0: i32) -> (i32, i32) {
    %c0_i32 = arith.constant 0 : i32
    %c0_i32_0 = arith.constant 0 : i32
    %c0_i32_1 = arith.constant 0 : i32
    return %c0_i32, %c0_i32_0 : i32, i32
  }
  func.func @transform_4(%arg0: i32) -> (i32, i32) {
    %c0_i32 = arith.constant 0 : i32
    %c0_i32_0 = arith.constant 0 : i32
    return %arg0, %c0_i32 : i32, i32
  }
}

module attributes {stable_mosaic.version = 11 : i64} {
  func.func @kernel(%arg0: i32, %arg1: memref<16x1024xf32, #tpu.memory_space<vmem>>, %arg2: memref<1024x128xbf16, #tpu.memory_space<vmem>>, %arg3: memref<128x128xbf16, #tpu.memory_space<vmem>>, %arg4: memref<2x128xf32, #tpu.memory_space<vmem>>, %arg5: memref<16x128xf32, #tpu.memory_space<vmem>>) attributes {dimension_semantics = [#tpu.dimension_semantics<parallel>], iteration_bounds = array<i64: 1>, scalar_prefetch = 0 : i64, scratch_operands = 0 : i64, tpu.core_type = #tpu.core_type<tc>, window_params = [{transform_indices = @transform_0, window_bounds = array<i64: 16, 1024>}, {pipeline_mode = #tpu.pipeline_mode<synchronous>, transform_indices = @transform_1, window_bounds = array<i64: 1024, 128>}, {pipeline_mode = #tpu.pipeline_mode<synchronous>, transform_indices = @transform_2, window_bounds = array<i64: 128, 128>}, {pipeline_mode = #tpu.pipeline_mode<synchronous>, transform_indices = @transform_3, window_bounds = array<i64: 2, 128>}, {transform_indices = @transform_4, window_bounds = array<i64: 16, 128>}]} {
    %c0 = arith.constant 0 : index
    %c0_0 = arith.constant 0 : index
    %0 = vector.load %arg4[%c0, %c0_0] : memref<2x128xf32, #tpu.memory_space<vmem>>, vector<2x128xf32>
    %c0_1 = arith.constant 0 : index
    %c0_2 = arith.constant 0 : index
    %1 = vector.load %arg1[%c0_1, %c0_2] : memref<16x1024xf32, #tpu.memory_space<vmem>>, vector<16x1024xf32>
    %2 = arith.truncf %1 : vector<16x1024xf32> to vector<16x1024xbf16>
    %c0_3 = arith.constant 0 : index
    %c0_4 = arith.constant 0 : index
    %3 = vector.load %arg2[%c0_3, %c0_4] : memref<1024x128xbf16, #tpu.memory_space<vmem>>, vector<1024x128xbf16>
    %4 = vector.extract_strided_slice %0 {offsets = [0, 0], sizes = [1, 128], strides = [1, 1]} : vector<2x128xf32> to vector<1x128xf32>
    %cst = arith.constant dense<0.000000e+00> : vector<16x128xf32>
    %5 = tpu.matmul %2, %3, %cst {dimension_numbers = #tpu.dot_dimension_numbers<[1], [0], [0], [1], [0, 0, 1, 1], [], []>} : vector<16x1024xbf16>, vector<1024x128xbf16>, vector<16x128xf32> -> vector<16x128xf32>
    %6 = vector.broadcast %4 : vector<1x128xf32> to vector<16x128xf32>
    %7 = arith.addf %5, %6 : vector<16x128xf32>
    %cst_5 = arith.constant 0.000000e+00 : f32
    %8 = vector.broadcast %cst_5 : f32 to vector<16x128xf32>
    %9 = arith.maximumf %7, %8 : vector<16x128xf32>
    %10 = arith.truncf %9 : vector<16x128xf32> to vector<16x128xbf16>
    %c0_6 = arith.constant 0 : index
    %c0_7 = arith.constant 0 : index
    %11 = vector.load %arg3[%c0_6, %c0_7] : memref<128x128xbf16, #tpu.memory_space<vmem>>, vector<128x128xbf16>
    %12 = vector.extract_strided_slice %0 {offsets = [1, 0], sizes = [1, 128], strides = [1, 1]} : vector<2x128xf32> to vector<1x128xf32>
    %cst_8 = arith.constant dense<0.000000e+00> : vector<16x128xf32>
    %13 = tpu.matmul %10, %11, %cst_8 {dimension_numbers = #tpu.dot_dimension_numbers<[1], [0], [0], [1], [0, 0, 1, 1], [], []>} : vector<16x128xbf16>, vector<128x128xbf16>, vector<16x128xf32> -> vector<16x128xf32>
    %14 = vector.broadcast %12 : vector<1x128xf32> to vector<16x128xf32>
    %15 = arith.addf %13, %14 : vector<16x128xf32>
    %c0_9 = arith.constant 0 : index
    %c0_10 = arith.constant 0 : index
    %16 = vector.load %arg5[%c0_9, %c0_10] : memref<16x128xf32, #tpu.memory_space<vmem>>, vector<16x128xf32>
    tpu.vector_store %arg5[%c0_9, %c0_10], %15 {strides = array<i32>} : memref<16x128xf32, #tpu.memory_space<vmem>>, vector<16x128xf32>,
    return
  }
  func.func @transform_0(%arg0: i32) -> (i32, i32) {
    %c0_i32 = arith.constant 0 : i32
    %c0_i32_0 = arith.constant 0 : i32
    return %arg0, %c0_i32 : i32, i32
  }
  func.func @transform_1(%arg0: i32) -> (i32, i32) {
    %c0_i32 = arith.constant 0 : i32
    %c0_i32_0 = arith.constant 0 : i32
    %c0_i32_1 = arith.constant 0 : i32
    return %c0_i32, %c0_i32_0 : i32, i32
  }
  func.func @transform_2(%arg0: i32) -> (i32, i32) {
    %c0_i32 = arith.constant 0 : i32
    %c0_i32_0 = arith.constant 0 : i32
    %c0_i32_1 = arith.constant 0 : i32
    return %c0_i32, %c0_i32_0 : i32, i32
  }
  func.func @transform_3(%arg0: i32) -> (i32, i32) {
    %c0_i32 = arith.constant 0 : i32
    %c0_i32_0 = arith.constant 0 : i32
    %c0_i32_1 = arith.constant 0 : i32
    return %c0_i32, %c0_i32_0 : i32, i32
  }
  func.func @transform_4(%arg0: i32) -> (i32, i32) {
    %c0_i32 = arith.constant 0 : i32
    %c0_i32_0 = arith.constant 0 : i32
    return %arg0, %c0_i32 : i32, i32
  }
}

</mosaic_0001>

<llo_original>
// kernel: tpu_custom_call.1
$region0: #{tpu_custom_call.1}
  #allocation0 [shape = 'u32[]', space=smem, size = 0x4, offset = 0x4, fixed_abs, tag = 'smem constant byte address 0x4 - core index']
  #allocation1 [shape = 'u32[144,128]{1,0:T(1,128)}', space=vmem, size = 0x12000, scoped, tag = 'internal scratch']
  %s0 = inlined_call_operand.hbm [shape: f32[16,1024], index: 0, kind: input, shape index: {}]
  %s1 = inlined_call_operand.hbm [shape: bf16[1024,128], index: 1, kind: input, shape index: {}]
  %s2 = inlined_call_operand.hbm [shape: bf16[128,128], index: 2, kind: input, shape index: {}]
  %s3 = inlined_call_operand.vmem [shape: f32[2,128], index: 3, kind: input, shape index: {}]
  %s4 = inlined_call_operand.hbm [shape: f32[16,128], index: 4, kind: output, shape index: {}]
  %s5 = sld [smem:[#allocation0]]
  $region38: #{tpu_custom_call.1} parent=0
    _
  %s7 = ssub.s32 1, %s5
  %s8 = scalar_select 0, %s7, %s5
  $region1: #{tpu_custom_call.1} parent=0
    #allocation2 [shape = 'u8[65536]{0}', space=vmem, size = 0x10000, scoped, tag = 'input window, operand 0, single buffered']
    #allocation3 [shape = 's32[1]{0}', space=sflag, size = 0x4, scoped, tag = 'scoped memory for tpu_custom_call.1']
    #allocation4 [shape = 's32[1]{0}', space=sflag, size = 0x4, scoped, tag = 'scoped memory for tpu_custom_call.1']
    #allocation5 [shape = 'u8[262144]{0}', space=vmem, size = 0x40000, scoped, tag = 'input window, operand 1, single buffered']
    #allocation6 [shape = 's32[1]{0}', space=sflag, size = 0x4, scoped, tag = 'scoped memory for tpu_custom_call.1']
    #allocation7 [shape = 'u8[32768]{0}', space=vmem, size = 0x8000, scoped, tag = 'input window, operand 2, single buffered']
    #allocation8 [shape = 'u8[8192]{0}', space=vmem, size = 0x2000, scoped, tag = 'output window, operand 0, single buffered']
    %9 = vsyncpa [#allocation3], 0
    %10 = vsyncpa [#allocation6], 0
    %11 = vsyncpa [#allocation4], 0
    // Predicated region
    $region2: #{tpu_custom_call.1} parent=1 // pred_check
      _
    $region3: #{tpu_custom_call.1} parent=1 // pred_check_branch
      %13 = sbr.rel (0) target = $region5
    $region4: #{tpu_custom_call.1} parent=1 // pred_region
      %s15 = ssub.s32 2048, 2048
      %16 = vsyncadd [#allocation3], %s15
      %s17 = sshll.u32 [#allocation2], 4
      %s18 = int_to_ptr.vmem [resolvable:$true] %s17
      %23 = dma.hbm_to_vmem [thread:$0]  %s0, 2048, %s18, [#allocation3], 1024, 1024, 64
    $region5: #{tpu_custom_call.1} parent=1 // pred_fallthru
      _
    // Predicated region
    $region6: #{tpu_custom_call.1} parent=1 // pred_check
      _
    $region7: #{tpu_custom_call.1} parent=1 // pred_check_branch
      %25 = sbr.rel (0) target = $region9
    $region8: #{tpu_custom_call.1} parent=1 // pred_region
      %s27 = ssub.s32 8192, 8192
      %28 = vsyncadd [#allocation6], %s27
      %s29 = sshll.u32 [#allocation5], 4
      %s30 = int_to_ptr.vmem [resolvable:$true] %s29
      %35 = dma.hbm_to_vmem [thread:$0]  %s1, 8192, %s30, [#allocation6], 64, 64, 4
    $region9: #{tpu_custom_call.1} parent=1 // pred_fallthru
      _
    // Predicated region
    $region10: #{tpu_custom_call.1} parent=1 // pred_check
      _
    $region11: #{tpu_custom_call.1} parent=1 // pred_check_branch
      %37 = sbr.rel (0) target = $region13
    $region12: #{tpu_custom_call.1} parent=1 // pred_region
      %s39 = ssub.s32 1024, 1024
      %40 = vsyncadd [#allocation6], %s39
      %s41 = sshll.u32 [#allocation7], 4
      %s42 = int_to_ptr.vmem [resolvable:$true] %s41
      %47 = dma.hbm_to_vmem [thread:$0]  %s2, 1024, %s42, [#allocation6], 64, 64, 4
    $region13: #{tpu_custom_call.1} parent=1 // pred_fallthru
      _
    // Predicated region
    $region14: #{tpu_custom_call.1} parent=1 // pred_check
      _
    $region15: #{tpu_custom_call.1} parent=1 // pred_check_branch
      %49 = sbr.rel (0) target = $region17
    $region16: #{tpu_custom_call.1} parent=1 // pred_region
      _
    $region17: #{tpu_custom_call.1} parent=1 // pred_fallthru
      _
    // Predicated region
    $region18: #{tpu_custom_call.1} parent=1 // pred_check
      _
    $region19: #{tpu_custom_call.1} parent=1 // pred_check_branch
      %51 = sbr.rel (0) target = $region21
    $region20: #{tpu_custom_call.1} parent=1 // pred_region
      %52 = dma.done [#allocation3], 2048
    $region21: #{tpu_custom_call.1} parent=1 // pred_fallthru
      _
    // Predicated region
    $region22: #{tpu_custom_call.1} parent=1 // pred_check
      _
    $region23: #{tpu_custom_call.1} parent=1 // pred_check_branch
      %54 = sbr.rel (0) target = $region25
    $region24: #{tpu_custom_call.1} parent=1 // pred_region
      %55 = dma.done [#allocation6], 8192
    $region25: #{tpu_custom_call.1} parent=1 // pred_fallthru
      _
    // Predicated region
    $region26: #{tpu_custom_call.1} parent=1 // pred_check
      _
    $region27: #{tpu_custom_call.1} parent=1 // pred_check_branch
      %57 = sbr.rel (0) target = $region29
    $region28: #{tpu_custom_call.1} parent=1 // pred_region
      %58 = dma.done [#allocation6], 1024
    $region29: #{tpu_custom_call.1} parent=1 // pred_fallthru
      _
    %v60 = vld [vmem:[%s3] sm:$0x3]
    %v61 = vld [vmem:[#allocation2] sm:$0xff]
    %v62 = vld [vmem:[#allocation2 + $0x8] sm:$0xff]
    %v63 = vld [vmem:[#allocation2 + $0x10] sm:$0xff]
    %v64 = vld [vmem:[#allocation2 + $0x18] sm:$0xff]
    %v65 = vld [vmem:[#allocation2 + $0x20] sm:$0xff]
    %v66 = vld [vmem:[#allocation2 + $0x28] sm:$0xff]
    %v67 = vld [vmem:[#allocation2 + $0x30] sm:$0xff]
    %v68 = vld [vmem:[#allocation2 + $0x38] sm:$0xff]
    %v69 = vld [vmem:[#allocation2 + $0x40] sm:$0xff]
    %v70 = vld [vmem:[#allocation2 + $0x48] sm:$0xff]
    %v71 = vld [vmem:[#allocation2 + $0x50] sm:$0xff]
    %v72 = vld [vmem:[#allocation2 + $0x58] sm:$0xff]
    %v73 = vld [vmem:[#allocation2 + $0x60] sm:$0xff]
    %v74 = vld [vmem:[#allocation2 + $0x68] sm:$0xff]
    %v75 = vld [vmem:[#allocation2 + $0x70] sm:$0xff]
    %v76 = vld [vmem:[#allocation2 + $0x78] sm:$0xff]
    %v77 = vpack.c.bf16 %v69, %v61
    %v78 = vpack.c.bf16 %v70, %v62
    %v79 = vpack.c.bf16 %v71, %v63
    %v80 = vpack.c.bf16 %v72, %v64
    %v81 = vpack.c.bf16 %v73, %v65
    %v82 = vpack.c.bf16 %v74, %v66
    %v83 = vpack.c.bf16 %v75, %v67
    %v84 = vpack.c.bf16 %v76, %v68
    %v85 = vld [vmem:[#allocation5] sm:$0xf]
    %v86 = vld [vmem:[#allocation5 + $0x4] sm:$0xf]
    %v87 = vld [vmem:[#allocation5 + $0x8] sm:$0xf]
    %v88 = vld [vmem:[#allocation5 + $0xc] sm:$0xf]
    %v89 = vld [vmem:[#allocation5 + $0x10] sm:$0xf]
    %v90 = vld [vmem:[#allocation5 + $0x14] sm:$0xf]
    %v91 = vld [vmem:[#allocation5 + $0x18] sm:$0xf]
    %v92 = vld [vmem:[#allocation5 + $0x1c] sm:$0xf]
    %v93 = vld [vmem:[#allocation5 + $0x20] sm:$0xf]
    %v94 = vld [vmem:[#allocation5 + $0x24] sm:$0xf]
    %v95 = vld [vmem:[#allocation5 + $0x28] sm:$0xf]
    %v96 = vld [vmem:[#allocation5 + $0x2c] sm:$0xf]
    %v97 = vld [vmem:[#allocation5 + $0x30] sm:$0xf]
    %v98 = vld [vmem:[#allocation5 + $0x34] sm:$0xf]
    %v99 = vld [vmem:[#allocation5 + $0x38] sm:$0xf]
    %v100 = vld [vmem:[#allocation5 + $0x3c] sm:$0xf]
    %v101 = vld [vmem:[#allocation5 + $0x40] sm:$0xf]
    %v102 = vld [vmem:[#allocation5 + $0x44] sm:$0xf]
    %v103 = vld [vmem:[#allocation5 + $0x48] sm:$0xf]
    %v104 = vld [vmem:[#allocation5 + $0x4c] sm:$0xf]
    %v105 = vld [vmem:[#allocation5 + $0x50] sm:$0xf]
    %v106 = vld [vmem:[#allocation5 + $0x54] sm:$0xf]
    %v107 = vld [vmem:[#allocation5 + $0x58] sm:$0xf]
    %v108 = vld [vmem:[#allocation5 + $0x5c] sm:$0xf]
    %v109 = vld [vmem:[#allocation5 + $0x60] sm:$0xf]
    %v110 = vld [vmem:[#allocation5 + $0x64] sm:$0xf]
    %v111 = vld [vmem:[#allocation5 + $0x68] sm:$0xf]
    %v112 = vld [vmem:[#allocation5 + $0x6c] sm:$0xf]
    %v113 = vld [vmem:[#allocation5 + $0x70] sm:$0xf]
    %v114 = vld [vmem:[#allocation5 + $0x74] sm:$0xf]
    %v115 = vld [vmem:[#allocation5 + $0x78] sm:$0xf]
    %v116 = vld [vmem:[#allocation5 + $0x7c] sm:$0xf]
    %v117 = vld [vmem:[#allocation5 + $0x80] sm:$0xf]
    %v118 = vld [vmem:[#allocation5 + $0x84] sm:$0xf]
    %v119 = vld [vmem:[#allocation5 + $0x88] sm:$0xf]
    %v120 = vld [vmem:[#allocation5 + $0x8c] sm:$0xf]
    %v121 = vld [vmem:[#allocation5 + $0x90] sm:$0xf]
    %v122 = vld [vmem:[#allocation5 + $0x94] sm:$0xf]
    %v123 = vld [vmem:[#allocation5 + $0x98] sm:$0xf]
    %v124 = vld [vmem:[#allocation5 + $0x9c] sm:$0xf]
    %v125 = vld [vmem:[#allocation5 + $0xa0] sm:$0xf]
    %v126 = vld [vmem:[#allocation5 + $0xa4] sm:$0xf]
    %v127 = vld [vmem:[#allocation5 + $0xa8] sm:$0xf]
    %v128 = vld [vmem:[#allocation5 + $0xac] sm:$0xf]
    %v129 = vld [vmem:[#allocation5 + $0xb0] sm:$0xf]
    %v130 = vld [vmem:[#allocation5 + $0xb4] sm:$0xf]
    %v131 = vld [vmem:[#allocation5 + $0xb8] sm:$0xf]
    %v132 = vld [vmem:[#allocation5 + $0xbc] sm:$0xf]
    %v133 = vld [vmem:[#allocation5 + $0xc0] sm:$0xf]
    %v134 = vld [vmem:[#allocation5 + $0xc4] sm:$0xf]
    %v135 = vld [vmem:[#allocation5 + $0xc8] sm:$0xf]
    %v136 = vld [vmem:[#allocation5 + $0xcc] sm:$0xf]
    %v137 = vld [vmem:[#allocation5 + $0xd0] sm:$0xf]
    %v138 = vld [vmem:[#allocation5 + $0xd4] sm:$0xf]
    %v139 = vld [vmem:[#allocation5 + $0xd8] sm:$0xf]
    %v140 = vld [vmem:[#allocation5 + $0xdc] sm:$0xf]
    %v141 = vld [vmem:[#allocation5 + $0xe0] sm:$0xf]
    %v142 = vld [vmem:[#allocation5 + $0xe4] sm:$0xf]
    %v143 = vld [vmem:[#allocation5 + $0xe8] sm:$0xf]
    %v144 = vld [vmem:[#allocation5 + $0xec] sm:$0xf]
    %v145 = vld [vmem:[#allocation5 + $0xf0] sm:$0xf]
    %v146 = vld [vmem:[#allocation5 + $0xf4] sm:$0xf]
    %v147 = vld [vmem:[#allocation5 + $0xf8] sm:$0xf]
    %v148 = vld [vmem:[#allocation5 + $0xfc] sm:$0xf]
    %v149 = vld [vmem:[#allocation5 + $0x100] sm:$0xf]
    %v150 = vld [vmem:[#allocation5 + $0x104] sm:$0xf]
    %v151 = vld [vmem:[#allocation5 + $0x108] sm:$0xf]
    %v152 = vld [vmem:[#allocation5 + $0x10c] sm:$0xf]
    %v153 = vld [vmem:[#allocation5 + $0x110] sm:$0xf]
    %v154 = vld [vmem:[#allocation5 + $0x114] sm:$0xf]
    %v155 = vld [vmem:[#allocation5 + $0x118] sm:$0xf]
    %v156 = vld [vmem:[#allocation5 + $0x11c] sm:$0xf]
    %v157 = vld [vmem:[#allocation5 + $0x120] sm:$0xf]
    %v158 = vld [vmem:[#allocation5 + $0x124] sm:$0xf]
    %v159 = vld [vmem:[#allocation5 + $0x128] sm:$0xf]
    %v160 = vld [vmem:[#allocation5 + $0x12c] sm:$0xf]
    %v161 = vld [vmem:[#allocation5 + $0x130] sm:$0xf]
    %v162 = vld [vmem:[#allocation5 + $0x134] sm:$0xf]
    %v163 = vld [vmem:[#allocation5 + $0x138] sm:$0xf]
    %v164 = vld [vmem:[#allocation5 + $0x13c] sm:$0xf]
    %v165 = vld [vmem:[#allocation5 + $0x140] sm:$0xf]
    %v166 = vld [vmem:[#allocation5 + $0x144] sm:$0xf]
    %v167 = vld [vmem:[#allocation5 + $0x148] sm:$0xf]
    %v168 = vld [vmem:[#allocation5 + $0x14c] sm:$0xf]
    %v169 = vld [vmem:[#allocation5 + $0x150] sm:$0xf]
    %v170 = vld [vmem:[#allocation5 + $0x154] sm:$0xf]
    %v171 = vld [vmem:[#allocation5 + $0x158] sm:$0xf]
    %v172 = vld [vmem:[#allocation5 + $0x15c] sm:$0xf]
    %v173 = vld [vmem:[#allocation5 + $0x160] sm:$0xf]
    %v174 = vld [vmem:[#allocation5 + $0x164] sm:$0xf]
    %v175 = vld [vmem:[#allocation5 + $0x168] sm:$0xf]
    %v176 = vld [vmem:[#allocation5 + $0x16c] sm:$0xf]
    %v177 = vld [vmem:[#allocation5 + $0x170] sm:$0xf]
    %v178 = vld [vmem:[#allocation5 + $0x174] sm:$0xf]
    %v179 = vld [vmem:[#allocation5 + $0x178] sm:$0xf]
    %v180 = vld [vmem:[#allocation5 + $0x17c] sm:$0xf]
    %v181 = vld [vmem:[#allocation5 + $0x180] sm:$0xf]
    %v182 = vld [vmem:[#allocation5 + $0x184] sm:$0xf]
    %v183 = vld [vmem:[#allocation5 + $0x188] sm:$0xf]
    %v184 = vld [vmem:[#allocation5 + $0x18c] sm:$0xf]
    %v185 = vld [vmem:[#allocation5 + $0x190] sm:$0xf]
    %v186 = vld [vmem:[#allocation5 + $0x194] sm:$0xf]
    %v187 = vld [vmem:[#allocation5 + $0x198] sm:$0xf]
    %v188 = vld [vmem:[#allocation5 + $0x19c] sm:$0xf]
    %v189 = vld [vmem:[#allocation5 + $0x1a0] sm:$0xf]
    %v190 = vld [vmem:[#allocation5 + $0x1a4] sm:$0xf]
    %v191 = vld [vmem:[#allocation5 + $0x1a8] sm:$0xf]
    %v192 = vld [vmem:[#allocation5 + $0x1ac] sm:$0xf]
    %v193 = vld [vmem:[#allocation5 + $0x1b0] sm:$0xf]
    %v194 = vld [vmem:[#allocation5 + $0x1b4] sm:$0xf]
    %v195 = vld [vmem:[#allocation5 + $0x1b8] sm:$0xf]
    %v196 = vld [vmem:[#allocation5 + $0x1bc] sm:$0xf]
    %v197 = vld [vmem:[#allocation5 + $0x1c0] sm:$0xf]
    %v198 = vld [vmem:[#allocation5 + $0x1c4] sm:$0xf]
    %v199 = vld [vmem:[#allocation5 + $0x1c8] sm:$0xf]
    %v200 = vld [vmem:[#allocation5 + $0x1cc] sm:$0xf]
    %v201 = vld [vmem:[#allocation5 + $0x1d0] sm:$0xf]
    %v202 = vld [vmem:[#allocation5 + $0x1d4] sm:$0xf]
    %v203 = vld [vmem:[#allocation5 + $0x1d8] sm:$0xf]
    %v204 = vld [vmem:[#allocation5 + $0x1dc] sm:$0xf]
    %v205 = vld [vmem:[#allocation5 + $0x1e0] sm:$0xf]
    %v206 = vld [vmem:[#allocation5 + $0x1e4] sm:$0xf]
    %v207 = vld [vmem:[#allocation5 + $0x1e8] sm:$0xf]
    %v208 = vld [vmem:[#allocation5 + $0x1ec] sm:$0xf]
    %v209 = vld [vmem:[#allocation5 + $0x1f0] sm:$0xf]
    %v210 = vld [vmem:[#allocation5 + $0x1f4] sm:$0xf]
    %v211 = vld [vmem:[#allocation5 + $0x1f8] sm:$0xf]
    %v212 = vld [vmem:[#allocation5 + $0x1fc] sm:$0xf]
    %v213 = vlaneseq
    %v214 = vshrl.u32 %v213, 7
    %v215 = vsub.s32 0, %v214
    %v216 = vrot.slane %v60, %v215
    %v345 = vunpack.c.l.b16 %v85
    %v346 = vunpack.c.l.b16 %v86
    %v347 = vunpack.c.l.b16 %v87
    %v348 = vunpack.c.l.b16 %v88
    %v349 = vunpack.c.l.b16 %v89
    %v350 = vunpack.c.l.b16 %v90
    %v351 = vunpack.c.l.b16 %v91
    %v352 = vunpack.c.l.b16 %v92
    %v353 = vunpack.c.l.b16 %v93
    %v354 = vunpack.c.l.b16 %v94
    %v355 = vunpack.c.l.b16 %v95
    %v356 = vunpack.c.l.b16 %v96
    %v357 = vunpack.c.l.b16 %v97
    %v358 = vunpack.c.l.b16 %v98
    %v359 = vunpack.c.l.b16 %v99
    %v360 = vunpack.c.l.b16 %v100
    %v361 = vunpack.c.l.b16 %v101
    %v362 = vunpack.c.l.b16 %v102
    %v363 = vunpack.c.l.b16 %v103
    %v364 = vunpack.c.l.b16 %v104
    %v365 = vunpack.c.l.b16 %v105
    %v366 = vunpack.c.l.b16 %v106
    %v367 = vunpack.c.l.b16 %v107
    %v368 = vunpack.c.l.b16 %v108
    %v369 = vunpack.c.l.b16 %v109
    %v370 = vunpack.c.l.b16 %v110
    %v371 = vunpack.c.l.b16 %v111
    %v372 = vunpack.c.l.b16 %v112
    %v373 = vunpack.c.l.b16 %v113
    %v374 = vunpack.c.l.b16 %v114
    %v375 = vunpack.c.l.b16 %v115
    %v376 = vunpack.c.l.b16 %v116
    %v377 = vunpack.c.l.b16 %v117
    %v378 = vunpack.c.l.b16 %v118
    %v379 = vunpack.c.l.b16 %v119
    %v380 = vunpack.c.l.b16 %v120
    %v381 = vunpack.c.l.b16 %v121
    %v382 = vunpack.c.l.b16 %v122
    %v383 = vunpack.c.l.b16 %v123
    %v384 = vunpack.c.l.b16 %v124
    %v385 = vunpack.c.l.b16 %v125
    %v386 = vunpack.c.l.b16 %v126
    %v387 = vunpack.c.l.b16 %v127
    %v388 = vunpack.c.l.b16 %v128
    %v389 = vunpack.c.l.b16 %v129
    %v390 = vunpack.c.l.b16 %v130
    %v391 = vunpack.c.l.b16 %v131
    %v392 = vunpack.c.l.b16 %v132
    %v393 = vunpack.c.l.b16 %v133
    %v394 = vunpack.c.l.b16 %v134
    %v395 = vunpack.c.l.b16 %v135
    %v396 = vunpack.c.l.b16 %v136
    %v397 = vunpack.c.l.b16 %v137
    %v398 = vunpack.c.l.b16 %v138
    %v399 = vunpack.c.l.b16 %v139
    %v400 = vunpack.c.l.b16 %v140
    %v401 = vunpack.c.l.b16 %v141
    %v402 = vunpack.c.l.b16 %v142
    %v403 = vunpack.c.l.b16 %v143
    %v404 = vunpack.c.l.b16 %v144
    %v405 = vunpack.c.l.b16 %v145
    %v406 = vunpack.c.l.b16 %v146
    %v407 = vunpack.c.l.b16 %v147
    %v408 = vunpack.c.l.b16 %v148
    %v409 = vunpack.c.l.b16 %v149
    %v410 = vunpack.c.l.b16 %v150
    %v411 = vunpack.c.l.b16 %v151
    %v412 = vunpack.c.l.b16 %v152
    %v413 = vunpack.c.l.b16 %v153
    %v414 = vunpack.c.l.b16 %v154
    %v415 = vunpack.c.l.b16 %v155
    %v416 = vunpack.c.l.b16 %v156
    %v417 = vunpack.c.l.b16 %v157
    %v418 = vunpack.c.l.b16 %v158
    %v419 = vunpack.c.l.b16 %v159
    %v420 = vunpack.c.l.b16 %v160
    %v421 = vunpack.c.l.b16 %v161
    %v422 = vunpack.c.l.b16 %v162
    %v423 = vunpack.c.l.b16 %v163
    %v424 = vunpack.c.l.b16 %v164
    %v425 = vunpack.c.l.b16 %v165
    %v426 = vunpack.c.l.b16 %v166
    %v427 = vunpack.c.l.b16 %v167
    %v428 = vunpack.c.l.b16 %v168
    %v429 = vunpack.c.l.b16 %v169
    %v430 = vunpack.c.l.b16 %v170
    %v431 = vunpack.c.l.b16 %v171
    %v432 = vunpack.c.l.b16 %v172
    %v433 = vunpack.c.l.b16 %v173
    %v434 = vunpack.c.l.b16 %v174
    %v435 = vunpack.c.l.b16 %v175
    %v436 = vunpack.c.l.b16 %v176
    %v437 = vunpack.c.l.b16 %v177
    %v438 = vunpack.c.l.b16 %v178
    %v439 = vunpack.c.l.b16 %v179
    %v440 = vunpack.c.l.b16 %v180
    %v441 = vunpack.c.l.b16 %v181
    %v442 = vunpack.c.l.b16 %v182
    %v443 = vunpack.c.l.b16 %v183
    %v444 = vunpack.c.l.b16 %v184
    %v445 = vunpack.c.l.b16 %v185
    %v446 = vunpack.c.l.b16 %v186
    %v447 = vunpack.c.l.b16 %v187
    %v448 = vunpack.c.l.b16 %v188
    %v449 = vunpack.c.l.b16 %v189
    %v450 = vunpack.c.l.b16 %v190
    %v451 = vunpack.c.l.b16 %v191
    %v452 = vunpack.c.l.b16 %v192
    %v453 = vunpack.c.l.b16 %v193
    %v454 = vunpack.c.l.b16 %v194
    %v455 = vunpack.c.l.b16 %v195
    %v456 = vunpack.c.l.b16 %v196
    %v457 = vunpack.c.l.b16 %v197
    %v458 = vunpack.c.l.b16 %v198
    %v459 = vunpack.c.l.b16 %v199
    %v460 = vunpack.c.l.b16 %v200
    %v461 = vunpack.c.l.b16 %v201
    %v462 = vunpack.c.l.b16 %v202
    %v463 = vunpack.c.l.b16 %v203
    %v464 = vunpack.c.l.b16 %v204
    %v465 = vunpack.c.l.b16 %v205
    %v466 = vunpack.c.l.b16 %v206
    %v467 = vunpack.c.l.b16 %v207
    %v468 = vunpack.c.l.b16 %v208
    %v469 = vunpack.c.l.b16 %v209
    %v470 = vunpack.c.l.b16 %v210
    %v471 = vunpack.c.l.b16 %v211
    %v472 = vunpack.c.l.b16 %v212
    %v473 = vpack.c.b16 %v346, %v345
    %v474 = vpack.c.b16 %v348, %v347
    %v475 = vpack.c.b16 %v350, %v349
    %v476 = vpack.c.b16 %v352, %v351
    %v477 = vpack.c.b16 %v354, %v353
    %v478 = vpack.c.b16 %v356, %v355
    %v479 = vpack.c.b16 %v358, %v357
    %v480 = vpack.c.b16 %v360, %v359
    %v481 = vpack.c.b16 %v362, %v361
    %v482 = vpack.c.b16 %v364, %v363
    %v483 = vpack.c.b16 %v366, %v365
    %v484 = vpack.c.b16 %v368, %v367
    %v485 = vpack.c.b16 %v370, %v369
    %v486 = vpack.c.b16 %v372, %v371
    %v487 = vpack.c.b16 %v374, %v373
    %v488 = vpack.c.b16 %v376, %v375
    %v489 = vpack.c.b16 %v378, %v377
    %v490 = vpack.c.b16 %v380, %v379
    %v491 = vpack.c.b16 %v382, %v381
    %v492 = vpack.c.b16 %v384, %v383
    %v493 = vpack.c.b16 %v386, %v385
    %v494 = vpack.c.b16 %v388, %v387
    %v495 = vpack.c.b16 %v390, %v389
    %v496 = vpack.c.b16 %v392, %v391
    %v497 = vpack.c.b16 %v394, %v393
    %v498 = vpack.c.b16 %v396, %v395
    %v499 = vpack.c.b16 %v398, %v397
    %v500 = vpack.c.b16 %v400, %v399
    %v501 = vpack.c.b16 %v402, %v401
    %v502 = vpack.c.b16 %v404, %v403
    %v503 = vpack.c.b16 %v406, %v405
    %v504 = vpack.c.b16 %v408, %v407
    %v505 = vpack.c.b16 %v410, %v409
    %v506 = vpack.c.b16 %v412, %v411
    %v507 = vpack.c.b16 %v414, %v413
    %v508 = vpack.c.b16 %v416, %v415
    %v509 = vpack.c.b16 %v418, %v417
    %v510 = vpack.c.b16 %v420, %v419
    %v511 = vpack.c.b16 %v422, %v421
    %v512 = vpack.c.b16 %v424, %v423
    %v513 = vpack.c.b16 %v426, %v425
    %v514 = vpack.c.b16 %v428, %v427
    %v515 = vpack.c.b16 %v430, %v429
    %v516 = vpack.c.b16 %v432, %v431
    %v517 = vpack.c.b16 %v434, %v433
    %v518 = vpack.c.b16 %v436, %v435
    %v519 = vpack.c.b16 %v438, %v437
    %v520 = vpack.c.b16 %v440, %v439
    %v521 = vpack.c.b16 %v442, %v441
    %v522 = vpack.c.b16 %v444, %v443
    %v523 = vpack.c.b16 %v446, %v445
    %v524 = vpack.c.b16 %v448, %v447
    %v525 = vpack.c.b16 %v450, %v449
    %v526 = vpack.c.b16 %v452, %v451
    %v527 = vpack.c.b16 %v454, %v453
    %v528 = vpack.c.b16 %v456, %v455
    %v529 = vpack.c.b16 %v458, %v457
    %v530 = vpack.c.b16 %v460, %v459
    %v531 = vpack.c.b16 %v462, %v461
    %v532 = vpack.c.b16 %v464, %v463
    %v533 = vpack.c.b16 %v466, %v465
    %v534 = vpack.c.b16 %v468, %v467
    %v535 = vpack.c.b16 %v470, %v469
    %v536 = vpack.c.b16 %v472, %v471
    %601 = vmatprep.subr.bf16.mxu0 0
    %602 = vmatpush1.bf16.msra.mxu0 %v473
    %603 = vmatprep.subr.bf16.mxu0 0
    %604 = vmatpush1.bf16.msra.mxu0 %v474
    %605 = vmatprep.subr.bf16.mxu0 0
    %606 = vmatpush1.bf16.msra.mxu0 %v475
    %607 = vmatprep.subr.bf16.mxu0 0
    %608 = vmatpush1.bf16.msra.mxu0 %v476
    %609 = vmatprep.subr.bf16.mxu0 0
    %610 = vmatpush1.bf16.msra.mxu0 %v477
    %611 = vmatprep.subr.bf16.mxu0 0
    %612 = vmatpush1.bf16.msra.mxu0 %v478
    %613 = vmatprep.subr.bf16.mxu0 0
    %614 = vmatpush1.bf16.msra.mxu0 %v479
    %615 = vmatprep.subr.bf16.mxu0 0
    %616 = vmatpush1.bf16.msra.mxu0 %v480
    %617 = vmatprep.subr.bf16.mxu0 0
    %618 = vmatpush1.bf16.msra.mxu0 %v481
    %619 = vmatprep.subr.bf16.mxu0 0
    %620 = vmatpush1.bf16.msra.mxu0 %v482
    %621 = vmatprep.subr.bf16.mxu0 0
    %622 = vmatpush1.bf16.msra.mxu0 %v483
    %623 = vmatprep.subr.bf16.mxu0 0
    %624 = vmatpush1.bf16.msra.mxu0 %v484
    %625 = vmatprep.subr.bf16.mxu0 0
    %626 = vmatpush1.bf16.msra.mxu0 %v485
    %627 = vmatprep.subr.bf16.mxu0 0
    %628 = vmatpush1.bf16.msra.mxu0 %v486
    %629 = vmatprep.subr.bf16.mxu0 0
    %630 = vmatpush1.bf16.msra.mxu0 %v487
    %631 = vmatprep.subr.bf16.mxu0 0
    %632 = vmatpush1.bf16.msra.mxu0 %v488
    %633 = vmatprep.mubr.bf16.mxu0 %v78
    %634 = vmatmul.mubr.bf16.gmra.mrb[0].mxu0 %v77
    %v635 = vpop.f32.mrb[0].mxu0
    %v636 = vadd.f32 %v216, %v635
    %v637 = vpop.f32.mrb[0].mxu0
    %v638 = vpop.f32.mrb[0].mxu0
    %v639 = vadd.f32 %v216, %v638
    %v640 = vpop.f32.mrb[0].mxu0
    %641 = vdwg.mxu0
    %642 = vmatprep.subr.bf16.mxu0 0
    %643 = vmatpush1.bf16.msra.mxu0 %v489
    %644 = vmatprep.subr.bf16.mxu0 0
    %645 = vmatpush1.bf16.msra.mxu0 %v490
    %646 = vmatprep.subr.bf16.mxu0 0
    %647 = vmatpush1.bf16.msra.mxu0 %v491
    %648 = vmatprep.subr.bf16.mxu0 0
    %649 = vmatpush1.bf16.msra.mxu0 %v492
    %650 = vmatprep.subr.bf16.mxu0 0
    %651 = vmatpush1.bf16.msra.mxu0 %v493
    %652 = vmatprep.subr.bf16.mxu0 0
    %653 = vmatpush1.bf16.msra.mxu0 %v494
    %654 = vmatprep.subr.bf16.mxu0 0
    %655 = vmatpush1.bf16.msra.mxu0 %v495
    %656 = vmatprep.subr.bf16.mxu0 0
    %657 = vmatpush1.bf16.msra.mxu0 %v496
    %658 = vmatprep.subr.bf16.mxu0 0
    %659 = vmatpush1.bf16.msra.mxu0 %v497
    %660 = vmatprep.subr.bf16.mxu0 0
    %661 = vmatpush1.bf16.msra.mxu0 %v498
    %662 = vmatprep.subr.bf16.mxu0 0
    %663 = vmatpush1.bf16.msra.mxu0 %v499
    %664 = vmatprep.subr.bf16.mxu0 0
    %665 = vmatpush1.bf16.msra.mxu0 %v500
    %666 = vmatprep.subr.bf16.mxu0 0
    %667 = vmatpush1.bf16.msra.mxu0 %v501
    %668 = vmatprep.subr.bf16.mxu0 0
    %669 = vmatpush1.bf16.msra.mxu0 %v502
    %670 = vmatprep.subr.bf16.mxu0 0
    %671 = vmatpush1.bf16.msra.mxu0 %v503
    %672 = vmatprep.subr.bf16.mxu0 0
    %673 = vmatpush1.bf16.msra.mxu0 %v504
    %674 = vmatprep.mubr.bf16.mxu0 %v80
    %675 = vmatmul.mubr.bf16.gmra.mrb[0].mxu0 %v79
    %v676 = vpop.f32.mrb[0].mxu0
    %v677 = vadd.f32 %v636, %v676
    %v678 = vpop.f32.mrb[0].mxu0
    %v679 = vpop.f32.mrb[0].mxu0
    %v680 = vadd.f32 %v639, %v679
    %v681 = vpop.f32.mrb[0].mxu0
    %682 = vdwg.mxu0
    %683 = vmatprep.subr.bf16.mxu0 0
    %684 = vmatpush1.bf16.msra.mxu0 %v505
    %685 = vmatprep.subr.bf16.mxu0 0
    %686 = vmatpush1.bf16.msra.mxu0 %v506
    %687 = vmatprep.subr.bf16.mxu0 0
    %688 = vmatpush1.bf16.msra.mxu0 %v507
    %689 = vmatprep.subr.bf16.mxu0 0
    %690 = vmatpush1.bf16.msra.mxu0 %v508
    %691 = vmatprep.subr.bf16.mxu0 0
    %692 = vmatpush1.bf16.msra.mxu0 %v509
    %693 = vmatprep.subr.bf16.mxu0 0
    %694 = vmatpush1.bf16.msra.mxu0 %v510
    %695 = vmatprep.subr.bf16.mxu0 0
    %696 = vmatpush1.bf16.msra.mxu0 %v511
    %697 = vmatprep.subr.bf16.mxu0 0
    %698 = vmatpush1.bf16.msra.mxu0 %v512
    %699 = vmatprep.subr.bf16.mxu0 0
    %700 = vmatpush1.bf16.msra.mxu0 %v513
    %701 = vmatprep.subr.bf16.mxu0 0
    %702 = vmatpush1.bf16.msra.mxu0 %v514
    %703 = vmatprep.subr.bf16.mxu0 0
    %704 = vmatpush1.bf16.msra.mxu0 %v515
    %705 = vmatprep.subr.bf16.mxu0 0
    %706 = vmatpush1.bf16.msra.mxu0 %v516
    %707 = vmatprep.subr.bf16.mxu0 0
    %708 = vmatpush1.bf16.msra.mxu0 %v517
    %709 = vmatprep.subr.bf16.mxu0 0
    %710 = vmatpush1.bf16.msra.mxu0 %v518
    %711 = vmatprep.subr.bf16.mxu0 0
    %712 = vmatpush1.bf16.msra.mxu0 %v519
    %713 = vmatprep.subr.bf16.mxu0 0
    %714 = vmatpush1.bf16.msra.mxu0 %v520
    %715 = vmatprep.mubr.bf16.mxu0 %v82
    %716 = vmatmul.mubr.bf16.gmra.mrb[0].mxu0 %v81
    %v717 = vpop.f32.mrb[0].mxu0
    %v718 = vadd.f32 %v677, %v717
    %v719 = vpop.f32.mrb[0].mxu0
    %v720 = vpop.f32.mrb[0].mxu0
    %v721 = vadd.f32 %v680, %v720
    %v722 = vpop.f32.mrb[0].mxu0
    %723 = vdwg.mxu0
    %724 = vmatprep.subr.bf16.mxu0 0
    %725 = vmatpush1.bf16.msra.mxu0 %v521
    %726 = vmatprep.subr.bf16.mxu0 0
    %727 = vmatpush1.bf16.msra.mxu0 %v522
    %728 = vmatprep.subr.bf16.mxu0 0
    %729 = vmatpush1.bf16.msra.mxu0 %v523
    %730 = vmatprep.subr.bf16.mxu0 0
    %731 = vmatpush1.bf16.msra.mxu0 %v524
    %732 = vmatprep.subr.bf16.mxu0 0
    %733 = vmatpush1.bf16.msra.mxu0 %v525
    %734 = vmatprep.subr.bf16.mxu0 0
    %735 = vmatpush1.bf16.msra.mxu0 %v526
    %736 = vmatprep.subr.bf16.mxu0 0
    %737 = vmatpush1.bf16.msra.mxu0 %v527
    %738 = vmatprep.subr.bf16.mxu0 0
    %739 = vmatpush1.bf16.msra.mxu0 %v528
    %740 = vmatprep.subr.bf16.mxu0 0
    %741 = vmatpush1.bf16.msra.mxu0 %v529
    %742 = vmatprep.subr.bf16.mxu0 0
    %743 = vmatpush1.bf16.msra.mxu0 %v530
    %744 = vmatprep.subr.bf16.mxu0 0
    %745 = vmatpush1.bf16.msra.mxu0 %v531
    %746 = vmatprep.subr.bf16.mxu0 0
    %747 = vmatpush1.bf16.msra.mxu0 %v532
    %748 = vmatprep.subr.bf16.mxu0 0
    %749 = vmatpush1.bf16.msra.mxu0 %v533
    %750 = vmatprep.subr.bf16.mxu0 0
    %751 = vmatpush1.bf16.msra.mxu0 %v534
    %752 = vmatprep.subr.bf16.mxu0 0
    %753 = vmatpush1.bf16.msra.mxu0 %v535
    %754 = vmatprep.subr.bf16.mxu0 0
    %755 = vmatpush1.bf16.msra.mxu0 %v536
    %756 = vmatprep.mubr.bf16.mxu0 %v84
    %757 = vmatmul.mubr.bf16.gmra.mrb[0].mxu0 %v83
    %v758 = vpop.f32.mrb[0].mxu0
    %v759 = vadd.f32 %v718, %v758
    %v760 = vpop.f32.mrb[0].mxu0
    %v761 = vpop.f32.mrb[0].mxu0
    %v762 = vadd.f32 %v721, %v761
    %v763 = vpop.f32.mrb[0].mxu0
    %764 = vdwg.mxu0
    %v765 = vmax.f32 %v759, 0.0
    %v766 = vmax.f32 %v762, 0.0
    %v767 = vpack.c.bf16 %v766, %v765
    %v768 = vld [vmem:[#allocation7] sm:$0xf]
    %v769 = vld [vmem:[#allocation7 + $0x4] sm:$0xf]
    %v770 = vld [vmem:[#allocation7 + $0x8] sm:$0xf]
    %v771 = vld [vmem:[#allocation7 + $0xc] sm:$0xf]
    %v772 = vld [vmem:[#allocation7 + $0x10] sm:$0xf]
    %v773 = vld [vmem:[#allocation7 + $0x14] sm:$0xf]
    %v774 = vld [vmem:[#allocation7 + $0x18] sm:$0xf]
    %v775 = vld [vmem:[#allocation7 + $0x1c] sm:$0xf]
    %v776 = vld [vmem:[#allocation7 + $0x20] sm:$0xf]
    %v777 = vld [vmem:[#allocation7 + $0x24] sm:$0xf]
    %v778 = vld [vmem:[#allocation7 + $0x28] sm:$0xf]
    %v779 = vld [vmem:[#allocation7 + $0x2c] sm:$0xf]
    %v780 = vld [vmem:[#allocation7 + $0x30] sm:$0xf]
    %v781 = vld [vmem:[#allocation7 + $0x34] sm:$0xf]
    %v782 = vld [vmem:[#allocation7 + $0x38] sm:$0xf]
    %v783 = vld [vmem:[#allocation7 + $0x3c] sm:$0xf]
    %v784 = vlaneseq
    %v785 = vshrl.u32 %v784, 7
    %v786 = vsub.s32 1, %v785
    %v787 = vrot.slane %v60, %v786
    %v804 = vunpack.c.l.b16 %v768
    %v805 = vunpack.c.l.b16 %v769
    %v806 = vunpack.c.l.b16 %v770
    %v807 = vunpack.c.l.b16 %v771
    %v808 = vunpack.c.l.b16 %v772
    %v809 = vunpack.c.l.b16 %v773
    %v810 = vunpack.c.l.b16 %v774
    %v811 = vunpack.c.l.b16 %v775
    %v812 = vunpack.c.l.b16 %v776
    %v813 = vunpack.c.l.b16 %v777
    %v814 = vunpack.c.l.b16 %v778
    %v815 = vunpack.c.l.b16 %v779
    %v816 = vunpack.c.l.b16 %v780
    %v817 = vunpack.c.l.b16 %v781
    %v818 = vunpack.c.l.b16 %v782
    %v819 = vunpack.c.l.b16 %v783
    %v820 = vpack.c.b16 %v805, %v804
    %v821 = vpack.c.b16 %v807, %v806
    %v822 = vpack.c.b16 %v809, %v808
    %v823 = vpack.c.b16 %v811, %v810
    %v824 = vpack.c.b16 %v813, %v812
    %v825 = vpack.c.b16 %v815, %v814
    %v826 = vpack.c.b16 %v817, %v816
    %v827 = vpack.c.b16 %v819, %v818
    %836 = vmatprep.subr.bf16.mxu0 0
    %837 = vmatpush1.bf16.msra.mxu0 %v820
    %838 = vmatprep.subr.bf16.mxu0 0
    %839 = vmatpush1.bf16.msra.mxu0 %v821
    %840 = vmatprep.subr.bf16.mxu0 0
    %841 = vmatpush1.bf16.msra.mxu0 %v822
    %842 = vmatprep.subr.bf16.mxu0 0
    %843 = vmatpush1.bf16.msra.mxu0 %v823
    %844 = vmatprep.subr.bf16.mxu0 0
    %845 = vmatpush1.bf16.msra.mxu0 %v824
    %846 = vmatprep.subr.bf16.mxu0 0
    %847 = vmatpush1.bf16.msra.mxu0 %v825
    %848 = vmatprep.subr.bf16.mxu0 0
    %849 = vmatpush1.bf16.msra.mxu0 %v826
    %850 = vmatprep.subr.bf16.mxu0 0
    %851 = vmatpush1.bf16.msra.mxu0 %v827
    %852 = vmatprep.subr.bf16.mxu0 0
    %853 = vmatpush1.bf16.msra.mxu0 0
    %854 = vmatprep.subr.bf16.mxu0 0
    %855 = vmatpush1.bf16.msra.mxu0 0
    %856 = vmatprep.subr.bf16.mxu0 0
    %857 = vmatpush1.bf16.msra.mxu0 0
    %858 = vmatprep.subr.bf16.mxu0 0
    %859 = vmatpush1.bf16.msra.mxu0 0
    %860 = vmatprep.subr.bf16.mxu0 0
    %861 = vmatpush1.bf16.msra.mxu0 0
    %862 = vmatprep.subr.bf16.mxu0 0
    %863 = vmatpush1.bf16.msra.mxu0 0
    %864 = vmatprep.subr.bf16.mxu0 0
    %865 = vmatpush1.bf16.msra.mxu0 0
    %866 = vmatprep.subr.bf16.mxu0 0
    %867 = vmatpush1.bf16.msra.mxu0 0
    %868 = vmatprep.mubr.bf16.mxu0 0
    %869 = vmatmul.mubr.bf16.gmra.mrb[0].mxu0 %v767
    %v870 = vpop.f32.mrb[0].mxu0
    %v871 = vadd.f32 %v787, %v870
    %v872 = vpop.f32.mrb[0].mxu0
    %v873 = vpop.f32.mrb[0].mxu0
    %v874 = vadd.f32 %v787, %v873
    %v875 = vpop.f32.mrb[0].mxu0
    %876 = vdwg.mxu0
    %877 = vst [vmem:[#allocation8] sm:$0xff] %v871
    %878 = vst [vmem:[#allocation8 + $0x8] sm:$0xff] %v874
    // Predicated region
    $region30: #{tpu_custom_call.1} parent=1 // pred_check
      _
    $region31: #{tpu_custom_call.1} parent=1 // pred_check_branch
      %880 = sbr.rel (0) target = $region33
    $region32: #{tpu_custom_call.1} parent=1 // pred_region
      %s882 = ssub.s32 256, 256
      %883 = vsyncadd [#allocation4], %s882
      %s884 = sshll.u32 [#allocation8], 4
      %s885 = int_to_ptr.vmem [resolvable:$true] %s884
      %890 = dma.vmem_to_hbm [thread:$0]  %s885, 256, %s4, [#allocation4], 128, 128, 8
    $region33: #{tpu_custom_call.1} parent=1 // pred_fallthru
      _
    // Predicated region
    $region34: #{tpu_custom_call.1} parent=1 // pred_check
      _
    $region35: #{tpu_custom_call.1} parent=1 // pred_check_branch
      %892 = sbr.rel (0) target = $region37
    $region36: #{tpu_custom_call.1} parent=1 // pred_region
      %893 = dma.done [#allocation4], 256
    $region37: #{tpu_custom_call.1} parent=1 // pred_fallthru
      _
    %894 = vsyncpa [#allocation3], 1
    %895 = vsyncpa [#allocation6], 1
    %896 = vsyncpa [#allocation4], 1

// kernel: tpu_custom_call.1
$region0: #{tpu_custom_call.1}
  #allocation0 [shape = 'u32[]', space=smem, size = 0x4, offset = 0x4, fixed_abs, tag = 'smem constant byte address 0x4 - core index']
  #allocation1 [shape = 'u32[144,128]{1,0:T(1,128)}', space=vmem, size = 0x12000, scoped, tag = 'internal scratch']
  %s0 = inlined_call_operand.hbm [shape: f32[16,1024], index: 0, kind: input, shape index: {}]
  %s1 = inlined_call_operand.hbm [shape: bf16[1024,128], index: 1, kind: input, shape index: {}]
  %s2 = inlined_call_operand.hbm [shape: bf16[128,128], index: 2, kind: input, shape index: {}]
  %s3 = inlined_call_operand.vmem [shape: f32[2,128], index: 3, kind: input, shape index: {}]
  %s4 = inlined_call_operand.hbm [shape: f32[16,128], index: 4, kind: output, shape index: {}]
  %s5 = sld [smem:[#allocation0]]
  $region38: #{tpu_custom_call.1} parent=0
    _
  %s7 = ssub.s32 1, %s5
  %s8 = scalar_select 0, %s7, %s5
  $region1: #{tpu_custom_call.1} parent=0
    #allocation2 [shape = 'u8[65536]{0}', space=vmem, size = 0x10000, scoped, tag = 'input window, operand 0, single buffered']
    #allocation3 [shape = 's32[1]{0}', space=sflag, size = 0x4, scoped, tag = 'scoped memory for tpu_custom_call.1']
    #allocation4 [shape = 's32[1]{0}', space=sflag, size = 0x4, scoped, tag = 'scoped memory for tpu_custom_call.1']
    #allocation5 [shape = 'u8[262144]{0}', space=vmem, size = 0x40000, scoped, tag = 'input window, operand 1, single buffered']
    #allocation6 [shape = 's32[1]{0}', space=sflag, size = 0x4, scoped, tag = 'scoped memory for tpu_custom_call.1']
    #allocation7 [shape = 'u8[32768]{0}', space=vmem, size = 0x8000, scoped, tag = 'input window, operand 2, single buffered']
    #allocation8 [shape = 'u8[8192]{0}', space=vmem, size = 0x2000, scoped, tag = 'output window, operand 0, single buffered']
    %9 = vsyncpa [#allocation3], 0
    %10 = vsyncpa [#allocation6], 0
    %11 = vsyncpa [#allocation4], 0
    // Predicated region
    $region2: #{tpu_custom_call.1} parent=1 // pred_check
      _
    $region3: #{tpu_custom_call.1} parent=1 // pred_check_branch
      %13 = sbr.rel (0) target = $region5
    $region4: #{tpu_custom_call.1} parent=1 // pred_region
      %s15 = ssub.s32 2048, 2048
      %16 = vsyncadd [#allocation3], %s15
      %s17 = sshll.u32 [#allocation2], 4
      %s18 = int_to_ptr.vmem [resolvable:$true] %s17
      %23 = dma.hbm_to_vmem [thread:$0]  %s0, 2048, %s18, [#allocation3], 1024, 1024, 64
    $region5: #{tpu_custom_call.1} parent=1 // pred_fallthru
      _
    // Predicated region
    $region6: #{tpu_custom_call.1} parent=1 // pred_check
      _
    $region7: #{tpu_custom_call.1} parent=1 // pred_check_branch
      %25 = sbr.rel (0) target = $region9
    $region8: #{tpu_custom_call.1} parent=1 // pred_region
      %s27 = ssub.s32 8192, 8192
      %28 = vsyncadd [#allocation6], %s27
      %s29 = sshll.u32 [#allocation5], 4
      %s30 = int_to_ptr.vmem [resolvable:$true] %s29
      %35 = dma.hbm_to_vmem [thread:$0]  %s1, 8192, %s30, [#allocation6], 64, 64, 4
    $region9: #{tpu_custom_call.1} parent=1 // pred_fallthru
      _
    // Predicated region
    $region10: #{tpu_custom_call.1} parent=1 // pred_check
      _
    $region11: #{tpu_custom_call.1} parent=1 // pred_check_branch
      %37 = sbr.rel (0) target = $region13
    $region12: #{tpu_custom_call.1} parent=1 // pred_region
      %s39 = ssub.s32 1024, 1024
      %40 = vsyncadd [#allocation6], %s39
      %s41 = sshll.u32 [#allocation7], 4
      %s42 = int_to_ptr.vmem [resolvable:$true] %s41
      %47 = dma.hbm_to_vmem [thread:$0]  %s2, 1024, %s42, [#allocation6], 64, 64, 4
    $region13: #{tpu_custom_call.1} parent=1 // pred_fallthru
      _
    // Predicated region
    $region14: #{tpu_custom_call.1} parent=1 // pred_check
      _
    $region15: #{tpu_custom_call.1} parent=1 // pred_check_branch
      %49 = sbr.rel (0) target = $region17
    $region16: #{tpu_custom_call.1} parent=1 // pred_region
      _
    $region17: #{tpu_custom_call.1} parent=1 // pred_fallthru
      _
    // Predicated region
    $region18: #{tpu_custom_call.1} parent=1 // pred_check
      _
    $region19: #{tpu_custom_call.1} parent=1 // pred_check_branch
      %51 = sbr.rel (0) target = $region21
    $region20: #{tpu_custom_call.1} parent=1 // pred_region
      %52 = dma.done [#allocation3], 2048
    $region21: #{tpu_custom_call.1} parent=1 // pred_fallthru
      _
    // Predicated region
    $region22: #{tpu_custom_call.1} parent=1 // pred_check
      _
    $region23: #{tpu_custom_call.1} parent=1 // pred_check_branch
      %54 = sbr.rel (0) target = $region25
    $region24: #{tpu_custom_call.1} parent=1 // pred_region
      %55 = dma.done [#allocation6], 8192
    $region25: #{tpu_custom_call.1} parent=1 // pred_fallthru
      _
    // Predicated region
    $region26: #{tpu_custom_call.1} parent=1 // pred_check
      _
    $region27: #{tpu_custom_call.1} parent=1 // pred_check_branch
      %57 = sbr.rel (0) target = $region29
    $region28: #{tpu_custom_call.1} parent=1 // pred_region
      %58 = dma.done [#allocation6], 1024
    $region29: #{tpu_custom_call.1} parent=1 // pred_fallthru
      _
    %v60 = vld [vmem:[%s3] sm:$0x3]
    %v61 = vld [vmem:[#allocation2] sm:$0xff]
    %v62 = vld [vmem:[#allocation2 + $0x8] sm:$0xff]
    %v63 = vld [vmem:[#allocation2 + $0x10] sm:$0xff]
    %v64 = vld [vmem:[#allocation2 + $0x18] sm:$0xff]
    %v65 = vld [vmem:[#allocation2 + $0x20] sm:$0xff]
    %v66 = vld [vmem:[#allocation2 + $0x28] sm:$0xff]
    %v67 = vld [vmem:[#allocation2 + $0x30] sm:$0xff]
    %v68 = vld [vmem:[#allocation2 + $0x38] sm:$0xff]
    %v69 = vld [vmem:[#allocation2 + $0x40] sm:$0xff]
    %v70 = vld [vmem:[#allocation2 + $0x48] sm:$0xff]
    %v71 = vld [vmem:[#allocation2 + $0x50] sm:$0xff]
    %v72 = vld [vmem:[#allocation2 + $0x58] sm:$0xff]
    %v73 = vld [vmem:[#allocation2 + $0x60] sm:$0xff]
    %v74 = vld [vmem:[#allocation2 + $0x68] sm:$0xff]
    %v75 = vld [vmem:[#allocation2 + $0x70] sm:$0xff]
    %v76 = vld [vmem:[#allocation2 + $0x78] sm:$0xff]
    %v77 = vpack.c.bf16 %v69, %v61
    %v78 = vpack.c.bf16 %v70, %v62
    %v79 = vpack.c.bf16 %v71, %v63
    %v80 = vpack.c.bf16 %v72, %v64
    %v81 = vpack.c.bf16 %v73, %v65
    %v82 = vpack.c.bf16 %v74, %v66
    %v83 = vpack.c.bf16 %v75, %v67
    %v84 = vpack.c.bf16 %v76, %v68
    %v85 = vld [vmem:[#allocation5] sm:$0xf]
    %v86 = vld [vmem:[#allocation5 + $0x4] sm:$0xf]
    %v87 = vld [vmem:[#allocation5 + $0x8] sm:$0xf]
    %v88 = vld [vmem:[#allocation5 + $0xc] sm:$0xf]
    %v89 = vld [vmem:[#allocation5 + $0x10] sm:$0xf]
    %v90 = vld [vmem:[#allocation5 + $0x14] sm:$0xf]
    %v91 = vld [vmem:[#allocation5 + $0x18] sm:$0xf]
    %v92 = vld [vmem:[#allocation5 + $0x1c] sm:$0xf]
    %v93 = vld [vmem:[#allocation5 + $0x20] sm:$0xf]
    %v94 = vld [vmem:[#allocation5 + $0x24] sm:$0xf]
    %v95 = vld [vmem:[#allocation5 + $0x28] sm:$0xf]
    %v96 = vld [vmem:[#allocation5 + $0x2c] sm:$0xf]
    %v97 = vld [vmem:[#allocation5 + $0x30] sm:$0xf]
    %v98 = vld [vmem:[#allocation5 + $0x34] sm:$0xf]
    %v99 = vld [vmem:[#allocation5 + $0x38] sm:$0xf]
    %v100 = vld [vmem:[#allocation5 + $0x3c] sm:$0xf]
    %v101 = vld [vmem:[#allocation5 + $0x40] sm:$0xf]
    %v102 = vld [vmem:[#allocation5 + $0x44] sm:$0xf]
    %v103 = vld [vmem:[#allocation5 + $0x48] sm:$0xf]
    %v104 = vld [vmem:[#allocation5 + $0x4c] sm:$0xf]
    %v105 = vld [vmem:[#allocation5 + $0x50] sm:$0xf]
    %v106 = vld [vmem:[#allocation5 + $0x54] sm:$0xf]
    %v107 = vld [vmem:[#allocation5 + $0x58] sm:$0xf]
    %v108 = vld [vmem:[#allocation5 + $0x5c] sm:$0xf]
    %v109 = vld [vmem:[#allocation5 + $0x60] sm:$0xf]
    %v110 = vld [vmem:[#allocation5 + $0x64] sm:$0xf]
    %v111 = vld [vmem:[#allocation5 + $0x68] sm:$0xf]
    %v112 = vld [vmem:[#allocation5 + $0x6c] sm:$0xf]
    %v113 = vld [vmem:[#allocation5 + $0x70] sm:$0xf]
    %v114 = vld [vmem:[#allocation5 + $0x74] sm:$0xf]
    %v115 = vld [vmem:[#allocation5 + $0x78] sm:$0xf]
    %v116 = vld [vmem:[#allocation5 + $0x7c] sm:$0xf]
    %v117 = vld [vmem:[#allocation5 + $0x80] sm:$0xf]
    %v118 = vld [vmem:[#allocation5 + $0x84] sm:$0xf]
    %v119 = vld [vmem:[#allocation5 + $0x88] sm:$0xf]
    %v120 = vld [vmem:[#allocation5 + $0x8c] sm:$0xf]
    %v121 = vld [vmem:[#allocation5 + $0x90] sm:$0xf]
    %v122 = vld [vmem:[#allocation5 + $0x94] sm:$0xf]
    %v123 = vld [vmem:[#allocation5 + $0x98] sm:$0xf]
    %v124 = vld [vmem:[#allocation5 + $0x9c] sm:$0xf]
    %v125 = vld [vmem:[#allocation5 + $0xa0] sm:$0xf]
    %v126 = vld [vmem:[#allocation5 + $0xa4] sm:$0xf]
    %v127 = vld [vmem:[#allocation5 + $0xa8] sm:$0xf]
    %v128 = vld [vmem:[#allocation5 + $0xac] sm:$0xf]
    %v129 = vld [vmem:[#allocation5 + $0xb0] sm:$0xf]
    %v130 = vld [vmem:[#allocation5 + $0xb4] sm:$0xf]
    %v131 = vld [vmem:[#allocation5 + $0xb8] sm:$0xf]
    %v132 = vld [vmem:[#allocation5 + $0xbc] sm:$0xf]
    %v133 = vld [vmem:[#allocation5 + $0xc0] sm:$0xf]
    %v134 = vld [vmem:[#allocation5 + $0xc4] sm:$0xf]
    %v135 = vld [vmem:[#allocation5 + $0xc8] sm:$0xf]
    %v136 = vld [vmem:[#allocation5 + $0xcc] sm:$0xf]
    %v137 = vld [vmem:[#allocation5 + $0xd0] sm:$0xf]
    %v138 = vld [vmem:[#allocation5 + $0xd4] sm:$0xf]
    %v139 = vld [vmem:[#allocation5 + $0xd8] sm:$0xf]
    %v140 = vld [vmem:[#allocation5 + $0xdc] sm:$0xf]
    %v141 = vld [vmem:[#allocation5 + $0xe0] sm:$0xf]
    %v142 = vld [vmem:[#allocation5 + $0xe4] sm:$0xf]
    %v143 = vld [vmem:[#allocation5 + $0xe8] sm:$0xf]
    %v144 = vld [vmem:[#allocation5 + $0xec] sm:$0xf]
    %v145 = vld [vmem:[#allocation5 + $0xf0] sm:$0xf]
    %v146 = vld [vmem:[#allocation5 + $0xf4] sm:$0xf]
    %v147 = vld [vmem:[#allocation5 + $0xf8] sm:$0xf]
    %v148 = vld [vmem:[#allocation5 + $0xfc] sm:$0xf]
    %v149 = vld [vmem:[#allocation5 + $0x100] sm:$0xf]
    %v150 = vld [vmem:[#allocation5 + $0x104] sm:$0xf]
    %v151 = vld [vmem:[#allocation5 + $0x108] sm:$0xf]
    %v152 = vld [vmem:[#allocation5 + $0x10c] sm:$0xf]
    %v153 = vld [vmem:[#allocation5 + $0x110] sm:$0xf]
    %v154 = vld [vmem:[#allocation5 + $0x114] sm:$0xf]
    %v155 = vld [vmem:[#allocation5 + $0x118] sm:$0xf]
    %v156 = vld [vmem:[#allocation5 + $0x11c] sm:$0xf]
    %v157 = vld [vmem:[#allocation5 + $0x120] sm:$0xf]
    %v158 = vld [vmem:[#allocation5 + $0x124] sm:$0xf]
    %v159 = vld [vmem:[#allocation5 + $0x128] sm:$0xf]
    %v160 = vld [vmem:[#allocation5 + $0x12c] sm:$0xf]
    %v161 = vld [vmem:[#allocation5 + $0x130] sm:$0xf]
    %v162 = vld [vmem:[#allocation5 + $0x134] sm:$0xf]
    %v163 = vld [vmem:[#allocation5 + $0x138] sm:$0xf]
    %v164 = vld [vmem:[#allocation5 + $0x13c] sm:$0xf]
    %v165 = vld [vmem:[#allocation5 + $0x140] sm:$0xf]
    %v166 = vld [vmem:[#allocation5 + $0x144] sm:$0xf]
    %v167 = vld [vmem:[#allocation5 + $0x148] sm:$0xf]
    %v168 = vld [vmem:[#allocation5 + $0x14c] sm:$0xf]
    %v169 = vld [vmem:[#allocation5 + $0x150] sm:$0xf]
    %v170 = vld [vmem:[#allocation5 + $0x154] sm:$0xf]
    %v171 = vld [vmem:[#allocation5 + $0x158] sm:$0xf]
    %v172 = vld [vmem:[#allocation5 + $0x15c] sm:$0xf]
    %v173 = vld [vmem:[#allocation5 + $0x160] sm:$0xf]
    %v174 = vld [vmem:[#allocation5 + $0x164] sm:$0xf]
    %v175 = vld [vmem:[#allocation5 + $0x168] sm:$0xf]
    %v176 = vld [vmem:[#allocation5 + $0x16c] sm:$0xf]
    %v177 = vld [vmem:[#allocation5 + $0x170] sm:$0xf]
    %v178 = vld [vmem:[#allocation5 + $0x174] sm:$0xf]
    %v179 = vld [vmem:[#allocation5 + $0x178] sm:$0xf]
    %v180 = vld [vmem:[#allocation5 + $0x17c] sm:$0xf]
    %v181 = vld [vmem:[#allocation5 + $0x180] sm:$0xf]
    %v182 = vld [vmem:[#allocation5 + $0x184] sm:$0xf]
    %v183 = vld [vmem:[#allocation5 + $0x188] sm:$0xf]
    %v184 = vld [vmem:[#allocation5 + $0x18c] sm:$0xf]
    %v185 = vld [vmem:[#allocation5 + $0x190] sm:$0xf]
    %v186 = vld [vmem:[#allocation5 + $0x194] sm:$0xf]
    %v187 = vld [vmem:[#allocation5 + $0x198] sm:$0xf]
    %v188 = vld [vmem:[#allocation5 + $0x19c] sm:$0xf]
    %v189 = vld [vmem:[#allocation5 + $0x1a0] sm:$0xf]
    %v190 = vld [vmem:[#allocation5 + $0x1a4] sm:$0xf]
    %v191 = vld [vmem:[#allocation5 + $0x1a8] sm:$0xf]
    %v192 = vld [vmem:[#allocation5 + $0x1ac] sm:$0xf]
    %v193 = vld [vmem:[#allocation5 + $0x1b0] sm:$0xf]
    %v194 = vld [vmem:[#allocation5 + $0x1b4] sm:$0xf]
    %v195 = vld [vmem:[#allocation5 + $0x1b8] sm:$0xf]
    %v196 = vld [vmem:[#allocation5 + $0x1bc] sm:$0xf]
    %v197 = vld [vmem:[#allocation5 + $0x1c0] sm:$0xf]
    %v198 = vld [vmem:[#allocation5 + $0x1c4] sm:$0xf]
    %v199 = vld [vmem:[#allocation5 + $0x1c8] sm:$0xf]
    %v200 = vld [vmem:[#allocation5 + $0x1cc] sm:$0xf]
    %v201 = vld [vmem:[#allocation5 + $0x1d0] sm:$0xf]
    %v202 = vld [vmem:[#allocation5 + $0x1d4] sm:$0xf]
    %v203 = vld [vmem:[#allocation5 + $0x1d8] sm:$0xf]
    %v204 = vld [vmem:[#allocation5 + $0x1dc] sm:$0xf]
    %v205 = vld [vmem:[#allocation5 + $0x1e0] sm:$0xf]
    %v206 = vld [vmem:[#allocation5 + $0x1e4] sm:$0xf]
    %v207 = vld [vmem:[#allocation5 + $0x1e8] sm:$0xf]
    %v208 = vld [vmem:[#allocation5 + $0x1ec] sm:$0xf]
    %v209 = vld [vmem:[#allocation5 + $0x1f0] sm:$0xf]
    %v210 = vld [vmem:[#allocation5 + $0x1f4] sm:$0xf]
    %v211 = vld [vmem:[#allocation5 + $0x1f8] sm:$0xf]
    %v212 = vld [vmem:[#allocation5 + $0x1fc] sm:$0xf]
    %v213 = vlaneseq
    %v214 = vshrl.u32 %v213, 7
    %v215 = vsub.s32 0, %v214
    %v216 = vrot.slane %v60, %v215
    %v345 = vunpack.c.l.b16 %v85
    %v346 = vunpack.c.l.b16 %v86
    %v347 = vunpack.c.l.b16 %v87
    %v348 = vunpack.c.l.b16 %v88
    %v349 = vunpack.c.l.b16 %v89
    %v350 = vunpack.c.l.b16 %v90
    %v351 = vunpack.c.l.b16 %v91
    %v352 = vunpack.c.l.b16 %v92
    %v353 = vunpack.c.l.b16 %v93
    %v354 = vunpack.c.l.b16 %v94
    %v355 = vunpack.c.l.b16 %v95
    %v356 = vunpack.c.l.b16 %v96
    %v357 = vunpack.c.l.b16 %v97
    %v358 = vunpack.c.l.b16 %v98
    %v359 = vunpack.c.l.b16 %v99
    %v360 = vunpack.c.l.b16 %v100
    %v361 = vunpack.c.l.b16 %v101
    %v362 = vunpack.c.l.b16 %v102
    %v363 = vunpack.c.l.b16 %v103
    %v364 = vunpack.c.l.b16 %v104
    %v365 = vunpack.c.l.b16 %v105
    %v366 = vunpack.c.l.b16 %v106
    %v367 = vunpack.c.l.b16 %v107
    %v368 = vunpack.c.l.b16 %v108
    %v369 = vunpack.c.l.b16 %v109
    %v370 = vunpack.c.l.b16 %v110
    %v371 = vunpack.c.l.b16 %v111
    %v372 = vunpack.c.l.b16 %v112
    %v373 = vunpack.c.l.b16 %v113
    %v374 = vunpack.c.l.b16 %v114
    %v375 = vunpack.c.l.b16 %v115
    %v376 = vunpack.c.l.b16 %v116
    %v377 = vunpack.c.l.b16 %v117
    %v378 = vunpack.c.l.b16 %v118
    %v379 = vunpack.c.l.b16 %v119
    %v380 = vunpack.c.l.b16 %v120
    %v381 = vunpack.c.l.b16 %v121
    %v382 = vunpack.c.l.b16 %v122
    %v383 = vunpack.c.l.b16 %v123
    %v384 = vunpack.c.l.b16 %v124
    %v385 = vunpack.c.l.b16 %v125
    %v386 = vunpack.c.l.b16 %v126
    %v387 = vunpack.c.l.b16 %v127
    %v388 = vunpack.c.l.b16 %v128
    %v389 = vunpack.c.l.b16 %v129
    %v390 = vunpack.c.l.b16 %v130
    %v391 = vunpack.c.l.b16 %v131
    %v392 = vunpack.c.l.b16 %v132
    %v393 = vunpack.c.l.b16 %v133
    %v394 = vunpack.c.l.b16 %v134
    %v395 = vunpack.c.l.b16 %v135
    %v396 = vunpack.c.l.b16 %v136
    %v397 = vunpack.c.l.b16 %v137
    %v398 = vunpack.c.l.b16 %v138
    %v399 = vunpack.c.l.b16 %v139
    %v400 = vunpack.c.l.b16 %v140
    %v401 = vunpack.c.l.b16 %v141
    %v402 = vunpack.c.l.b16 %v142
    %v403 = vunpack.c.l.b16 %v143
    %v404 = vunpack.c.l.b16 %v144
    %v405 = vunpack.c.l.b16 %v145
    %v406 = vunpack.c.l.b16 %v146
    %v407 = vunpack.c.l.b16 %v147
    %v408 = vunpack.c.l.b16 %v148
    %v409 = vunpack.c.l.b16 %v149
    %v410 = vunpack.c.l.b16 %v150
    %v411 = vunpack.c.l.b16 %v151
    %v412 = vunpack.c.l.b16 %v152
    %v413 = vunpack.c.l.b16 %v153
    %v414 = vunpack.c.l.b16 %v154
    %v415 = vunpack.c.l.b16 %v155
    %v416 = vunpack.c.l.b16 %v156
    %v417 = vunpack.c.l.b16 %v157
    %v418 = vunpack.c.l.b16 %v158
    %v419 = vunpack.c.l.b16 %v159
    %v420 = vunpack.c.l.b16 %v160
    %v421 = vunpack.c.l.b16 %v161
    %v422 = vunpack.c.l.b16 %v162
    %v423 = vunpack.c.l.b16 %v163
    %v424 = vunpack.c.l.b16 %v164
    %v425 = vunpack.c.l.b16 %v165
    %v426 = vunpack.c.l.b16 %v166
    %v427 = vunpack.c.l.b16 %v167
    %v428 = vunpack.c.l.b16 %v168
    %v429 = vunpack.c.l.b16 %v169
    %v430 = vunpack.c.l.b16 %v170
    %v431 = vunpack.c.l.b16 %v171
    %v432 = vunpack.c.l.b16 %v172
    %v433 = vunpack.c.l.b16 %v173
    %v434 = vunpack.c.l.b16 %v174
    %v435 = vunpack.c.l.b16 %v175
    %v436 = vunpack.c.l.b16 %v176
    %v437 = vunpack.c.l.b16 %v177
    %v438 = vunpack.c.l.b16 %v178
    %v439 = vunpack.c.l.b16 %v179
    %v440 = vunpack.c.l.b16 %v180
    %v441 = vunpack.c.l.b16 %v181
    %v442 = vunpack.c.l.b16 %v182
    %v443 = vunpack.c.l.b16 %v183
    %v444 = vunpack.c.l.b16 %v184
    %v445 = vunpack.c.l.b16 %v185
    %v446 = vunpack.c.l.b16 %v186
    %v447 = vunpack.c.l.b16 %v187
    %v448 = vunpack.c.l.b16 %v188
    %v449 = vunpack.c.l.b16 %v189
    %v450 = vunpack.c.l.b16 %v190
    %v451 = vunpack.c.l.b16 %v191
    %v452 = vunpack.c.l.b16 %v192
    %v453 = vunpack.c.l.b16 %v193
    %v454 = vunpack.c.l.b16 %v194
    %v455 = vunpack.c.l.b16 %v195
    %v456 = vunpack.c.l.b16 %v196
    %v457 = vunpack.c.l.b16 %v197
    %v458 = vunpack.c.l.b16 %v198
    %v459 = vunpack.c.l.b16 %v199
    %v460 = vunpack.c.l.b16 %v200
    %v461 = vunpack.c.l.b16 %v201
    %v462 = vunpack.c.l.b16 %v202
    %v463 = vunpack.c.l.b16 %v203
    %v464 = vunpack.c.l.b16 %v204
    %v465 = vunpack.c.l.b16 %v205
    %v466 = vunpack.c.l.b16 %v206
    %v467 = vunpack.c.l.b16 %v207
    %v468 = vunpack.c.l.b16 %v208
    %v469 = vunpack.c.l.b16 %v209
    %v470 = vunpack.c.l.b16 %v210
    %v471 = vunpack.c.l.b16 %v211
    %v472 = vunpack.c.l.b16 %v212
    %v473 = vpack.c.b16 %v346, %v345
    %v474 = vpack.c.b16 %v348, %v347
    %v475 = vpack.c.b16 %v350, %v349
    %v476 = vpack.c.b16 %v352, %v351
    %v477 = vpack.c.b16 %v354, %v353
    %v478 = vpack.c.b16 %v356, %v355
    %v479 = vpack.c.b16 %v358, %v357
    %v480 = vpack.c.b16 %v360, %v359
    %v481 = vpack.c.b16 %v362, %v361
    %v482 = vpack.c.b16 %v364, %v363
    %v483 = vpack.c.b16 %v366, %v365
    %v484 = vpack.c.b16 %v368, %v367
    %v485 = vpack.c.b16 %v370, %v369
    %v486 = vpack.c.b16 %v372, %v371
    %v487 = vpack.c.b16 %v374, %v373
    %v488 = vpack.c.b16 %v376, %v375
    %v489 = vpack.c.b16 %v378, %v377
    %v490 = vpack.c.b16 %v380, %v379
    %v491 = vpack.c.b16 %v382, %v381
    %v492 = vpack.c.b16 %v384, %v383
    %v493 = vpack.c.b16 %v386, %v385
    %v494 = vpack.c.b16 %v388, %v387
    %v495 = vpack.c.b16 %v390, %v389
    %v496 = vpack.c.b16 %v392, %v391
    %v497 = vpack.c.b16 %v394, %v393
    %v498 = vpack.c.b16 %v396, %v395
    %v499 = vpack.c.b16 %v398, %v397
    %v500 = vpack.c.b16 %v400, %v399
    %v501 = vpack.c.b16 %v402, %v401
    %v502 = vpack.c.b16 %v404, %v403
    %v503 = vpack.c.b16 %v406, %v405
    %v504 = vpack.c.b16 %v408, %v407
    %v505 = vpack.c.b16 %v410, %v409
    %v506 = vpack.c.b16 %v412, %v411
    %v507 = vpack.c.b16 %v414, %v413
    %v508 = vpack.c.b16 %v416, %v415
    %v509 = vpack.c.b16 %v418, %v417
    %v510 = vpack.c.b16 %v420, %v419
    %v511 = vpack.c.b16 %v422, %v421
    %v512 = vpack.c.b16 %v424, %v423
    %v513 = vpack.c.b16 %v426, %v425
    %v514 = vpack.c.b16 %v428, %v427
    %v515 = vpack.c.b16 %v430, %v429
    %v516 = vpack.c.b16 %v432, %v431
    %v517 = vpack.c.b16 %v434, %v433
    %v518 = vpack.c.b16 %v436, %v435
    %v519 = vpack.c.b16 %v438, %v437
    %v520 = vpack.c.b16 %v440, %v439
    %v521 = vpack.c.b16 %v442, %v441
    %v522 = vpack.c.b16 %v444, %v443
    %v523 = vpack.c.b16 %v446, %v445
    %v524 = vpack.c.b16 %v448, %v447
    %v525 = vpack.c.b16 %v450, %v449
    %v526 = vpack.c.b16 %v452, %v451
    %v527 = vpack.c.b16 %v454, %v453
    %v528 = vpack.c.b16 %v456, %v455
    %v529 = vpack.c.b16 %v458, %v457
    %v530 = vpack.c.b16 %v460, %v459
    %v531 = vpack.c.b16 %v462, %v461
    %v532 = vpack.c.b16 %v464, %v463
    %v533 = vpack.c.b16 %v466, %v465
    %v534 = vpack.c.b16 %v468, %v467
    %v535 = vpack.c.b16 %v470, %v469
    %v536 = vpack.c.b16 %v472, %v471
    %601 = vmatprep.subr.bf16.mxu0 0
    %602 = vmatpush1.bf16.msra.mxu0 %v473
    %603 = vmatprep.subr.bf16.mxu0 0
    %604 = vmatpush1.bf16.msra.mxu0 %v474
    %605 = vmatprep.subr.bf16.mxu0 0
    %606 = vmatpush1.bf16.msra.mxu0 %v475
    %607 = vmatprep.subr.bf16.mxu0 0
    %608 = vmatpush1.bf16.msra.mxu0 %v476
    %609 = vmatprep.subr.bf16.mxu0 0
    %610 = vmatpush1.bf16.msra.mxu0 %v477
    %611 = vmatprep.subr.bf16.mxu0 0
    %612 = vmatpush1.bf16.msra.mxu0 %v478
    %613 = vmatprep.subr.bf16.mxu0 0
    %614 = vmatpush1.bf16.msra.mxu0 %v479
    %615 = vmatprep.subr.bf16.mxu0 0
    %616 = vmatpush1.bf16.msra.mxu0 %v480
    %617 = vmatprep.subr.bf16.mxu0 0
    %618 = vmatpush1.bf16.msra.mxu0 %v481
    %619 = vmatprep.subr.bf16.mxu0 0
    %620 = vmatpush1.bf16.msra.mxu0 %v482
    %621 = vmatprep.subr.bf16.mxu0 0
    %622 = vmatpush1.bf16.msra.mxu0 %v483
    %623 = vmatprep.subr.bf16.mxu0 0
    %624 = vmatpush1.bf16.msra.mxu0 %v484
    %625 = vmatprep.subr.bf16.mxu0 0
    %626 = vmatpush1.bf16.msra.mxu0 %v485
    %627 = vmatprep.subr.bf16.mxu0 0
    %628 = vmatpush1.bf16.msra.mxu0 %v486
    %629 = vmatprep.subr.bf16.mxu0 0
    %630 = vmatpush1.bf16.msra.mxu0 %v487
    %631 = vmatprep.subr.bf16.mxu0 0
    %632 = vmatpush1.bf16.msra.mxu0 %v488
    %633 = vmatprep.mubr.bf16.mxu0 %v78
    %634 = vmatmul.mubr.bf16.gmra.mrb[0].mxu0 %v77
    %v635 = vpop.f32.mrb[0].mxu0
    %v636 = vadd.f32 %v216, %v635
    %v637 = vpop.f32.mrb[0].mxu0
    %v638 = vpop.f32.mrb[0].mxu0
    %v639 = vadd.f32 %v216, %v638
    %v640 = vpop.f32.mrb[0].mxu0
    %641 = vdwg.mxu0
    %642 = vmatprep.subr.bf16.mxu0 0
    %643 = vmatpush1.bf16.msra.mxu0 %v489
    %644 = vmatprep.subr.bf16.mxu0 0
    %645 = vmatpush1.bf16.msra.mxu0 %v490
    %646 = vmatprep.subr.bf16.mxu0 0
    %647 = vmatpush1.bf16.msra.mxu0 %v491
    %648 = vmatprep.subr.bf16.mxu0 0
    %649 = vmatpush1.bf16.msra.mxu0 %v492
    %650 = vmatprep.subr.bf16.mxu0 0
    %651 = vmatpush1.bf16.msra.mxu0 %v493
    %652 = vmatprep.subr.bf16.mxu0 0
    %653 = vmatpush1.bf16.msra.mxu0 %v494
    %654 = vmatprep.subr.bf16.mxu0 0
    %655 = vmatpush1.bf16.msra.mxu0 %v495
    %656 = vmatprep.subr.bf16.mxu0 0
    %657 = vmatpush1.bf16.msra.mxu0 %v496
    %658 = vmatprep.subr.bf16.mxu0 0
    %659 = vmatpush1.bf16.msra.mxu0 %v497
    %660 = vmatprep.subr.bf16.mxu0 0
    %661 = vmatpush1.bf16.msra.mxu0 %v498
    %662 = vmatprep.subr.bf16.mxu0 0
    %663 = vmatpush1.bf16.msra.mxu0 %v499
    %664 = vmatprep.subr.bf16.mxu0 0
    %665 = vmatpush1.bf16.msra.mxu0 %v500
    %666 = vmatprep.subr.bf16.mxu0 0
    %667 = vmatpush1.bf16.msra.mxu0 %v501
    %668 = vmatprep.subr.bf16.mxu0 0
    %669 = vmatpush1.bf16.msra.mxu0 %v502
    %670 = vmatprep.subr.bf16.mxu0 0
    %671 = vmatpush1.bf16.msra.mxu0 %v503
    %672 = vmatprep.subr.bf16.mxu0 0
    %673 = vmatpush1.bf16.msra.mxu0 %v504
    %674 = vmatprep.mubr.bf16.mxu0 %v80
    %675 = vmatmul.mubr.bf16.gmra.mrb[0].mxu0 %v79
    %v676 = vpop.f32.mrb[0].mxu0
    %v677 = vadd.f32 %v636, %v676
    %v678 = vpop.f32.mrb[0].mxu0
    %v679 = vpop.f32.mrb[0].mxu0
    %v680 = vadd.f32 %v639, %v679
    %v681 = vpop.f32.mrb[0].mxu0
    %682 = vdwg.mxu0
    %683 = vmatprep.subr.bf16.mxu0 0
    %684 = vmatpush1.bf16.msra.mxu0 %v505
    %685 = vmatprep.subr.bf16.mxu0 0
    %686 = vmatpush1.bf16.msra.mxu0 %v506
    %687 = vmatprep.subr.bf16.mxu0 0
    %688 = vmatpush1.bf16.msra.mxu0 %v507
    %689 = vmatprep.subr.bf16.mxu0 0
    %690 = vmatpush1.bf16.msra.mxu0 %v508
    %691 = vmatprep.subr.bf16.mxu0 0
    %692 = vmatpush1.bf16.msra.mxu0 %v509
    %693 = vmatprep.subr.bf16.mxu0 0
    %694 = vmatpush1.bf16.msra.mxu0 %v510
    %695 = vmatprep.subr.bf16.mxu0 0
    %696 = vmatpush1.bf16.msra.mxu0 %v511
    %697 = vmatprep.subr.bf16.mxu0 0
    %698 = vmatpush1.bf16.msra.mxu0 %v512
    %699 = vmatprep.subr.bf16.mxu0 0
    %700 = vmatpush1.bf16.msra.mxu0 %v513
    %701 = vmatprep.subr.bf16.mxu0 0
    %702 = vmatpush1.bf16.msra.mxu0 %v514
    %703 = vmatprep.subr.bf16.mxu0 0
    %704 = vmatpush1.bf16.msra.mxu0 %v515
    %705 = vmatprep.subr.bf16.mxu0 0
    %706 = vmatpush1.bf16.msra.mxu0 %v516
    %707 = vmatprep.subr.bf16.mxu0 0
    %708 = vmatpush1.bf16.msra.mxu0 %v517
    %709 = vmatprep.subr.bf16.mxu0 0
    %710 = vmatpush1.bf16.msra.mxu0 %v518
    %711 = vmatprep.subr.bf16.mxu0 0
    %712 = vmatpush1.bf16.msra.mxu0 %v519
    %713 = vmatprep.subr.bf16.mxu0 0
    %714 = vmatpush1.bf16.msra.mxu0 %v520
    %715 = vmatprep.mubr.bf16.mxu0 %v82
    %716 = vmatmul.mubr.bf16.gmra.mrb[0].mxu0 %v81
    %v717 = vpop.f32.mrb[0].mxu0
    %v718 = vadd.f32 %v677, %v717
    %v719 = vpop.f32.mrb[0].mxu0
    %v720 = vpop.f32.mrb[0].mxu0
    %v721 = vadd.f32 %v680, %v720
    %v722 = vpop.f32.mrb[0].mxu0
    %723 = vdwg.mxu0
    %724 = vmatprep.subr.bf16.mxu0 0
    %725 = vmatpush1.bf16.msra.mxu0 %v521
    %726 = vmatprep.subr.bf16.mxu0 0
    %727 = vmatpush1.bf16.msra.mxu0 %v522
    %728 = vmatprep.subr.bf16.mxu0 0
    %729 = vmatpush1.bf16.msra.mxu0 %v523
    %730 = vmatprep.subr.bf16.mxu0 0
    %731 = vmatpush1.bf16.msra.mxu0 %v524
    %732 = vmatprep.subr.bf16.mxu0 0
    %733 = vmatpush1.bf16.msra.mxu0 %v525
    %734 = vmatprep.subr.bf16.mxu0 0
    %735 = vmatpush1.bf16.msra.mxu0 %v526
    %736 = vmatprep.subr.bf16.mxu0 0
    %737 = vmatpush1.bf16.msra.mxu0 %v527
    %738 = vmatprep.subr.bf16.mxu0 0
    %739 = vmatpush1.bf16.msra.mxu0 %v528
    %740 = vmatprep.subr.bf16.mxu0 0
    %741 = vmatpush1.bf16.msra.mxu0 %v529
    %742 = vmatprep.subr.bf16.mxu0 0
    %743 = vmatpush1.bf16.msra.mxu0 %v530
    %744 = vmatprep.subr.bf16.mxu0 0
    %745 = vmatpush1.bf16.msra.mxu0 %v531
    %746 = vmatprep.subr.bf16.mxu0 0
    %747 = vmatpush1.bf16.msra.mxu0 %v532
    %748 = vmatprep.subr.bf16.mxu0 0
    %749 = vmatpush1.bf16.msra.mxu0 %v533
    %750 = vmatprep.subr.bf16.mxu0 0
    %751 = vmatpush1.bf16.msra.mxu0 %v534
    %752 = vmatprep.subr.bf16.mxu0 0
    %753 = vmatpush1.bf16.msra.mxu0 %v535
    %754 = vmatprep.subr.bf16.mxu0 0
    %755 = vmatpush1.bf16.msra.mxu0 %v536
    %756 = vmatprep.mubr.bf16.mxu0 %v84
    %757 = vmatmul.mubr.bf16.gmra.mrb[0].mxu0 %v83
    %v758 = vpop.f32.mrb[0].mxu0
    %v759 = vadd.f32 %v718, %v758
    %v760 = vpop.f32.mrb[0].mxu0
    %v761 = vpop.f32.mrb[0].mxu0
    %v762 = vadd.f32 %v721, %v761
    %v763 = vpop.f32.mrb[0].mxu0
    %764 = vdwg.mxu0
    %v765 = vmax.f32 %v759, 0.0
    %v766 = vmax.f32 %v762, 0.0
    %v767 = vpack.c.bf16 %v766, %v765
    %v768 = vld [vmem:[#allocation7] sm:$0xf]
    %v769 = vld [vmem:[#allocation7 + $0x4] sm:$0xf]
    %v770 = vld [vmem:[#allocation7 + $0x8] sm:$0xf]
    %v771 = vld [vmem:[#allocation7 + $0xc] sm:$0xf]
    %v772 = vld [vmem:[#allocation7 + $0x10] sm:$0xf]
    %v773 = vld [vmem:[#allocation7 + $0x14] sm:$0xf]
    %v774 = vld [vmem:[#allocation7 + $0x18] sm:$0xf]
    %v775 = vld [vmem:[#allocation7 + $0x1c] sm:$0xf]
    %v776 = vld [vmem:[#allocation7 + $0x20] sm:$0xf]
    %v777 = vld [vmem:[#allocation7 + $0x24] sm:$0xf]
    %v778 = vld [vmem:[#allocation7 + $0x28] sm:$0xf]
    %v779 = vld [vmem:[#allocation7 + $0x2c] sm:$0xf]
    %v780 = vld [vmem:[#allocation7 + $0x30] sm:$0xf]
    %v781 = vld [vmem:[#allocation7 + $0x34] sm:$0xf]
    %v782 = vld [vmem:[#allocation7 + $0x38] sm:$0xf]
    %v783 = vld [vmem:[#allocation7 + $0x3c] sm:$0xf]
    %v784 = vlaneseq
    %v785 = vshrl.u32 %v784, 7
    %v786 = vsub.s32 1, %v785
    %v787 = vrot.slane %v60, %v786
    %v804 = vunpack.c.l.b16 %v768
    %v805 = vunpack.c.l.b16 %v769
    %v806 = vunpack.c.l.b16 %v770
    %v807 = vunpack.c.l.b16 %v771
    %v808 = vunpack.c.l.b16 %v772
    %v809 = vunpack.c.l.b16 %v773
    %v810 = vunpack.c.l.b16 %v774
    %v811 = vunpack.c.l.b16 %v775
    %v812 = vunpack.c.l.b16 %v776
    %v813 = vunpack.c.l.b16 %v777
    %v814 = vunpack.c.l.b16 %v778
    %v815 = vunpack.c.l.b16 %v779
    %v816 = vunpack.c.l.b16 %v780
    %v817 = vunpack.c.l.b16 %v781
    %v818 = vunpack.c.l.b16 %v782
    %v819 = vunpack.c.l.b16 %v783
    %v820 = vpack.c.b16 %v805, %v804
    %v821 = vpack.c.b16 %v807, %v806
    %v822 = vpack.c.b16 %v809, %v808
    %v823 = vpack.c.b16 %v811, %v810
    %v824 = vpack.c.b16 %v813, %v812
    %v825 = vpack.c.b16 %v815, %v814
    %v826 = vpack.c.b16 %v817, %v816
    %v827 = vpack.c.b16 %v819, %v818
    %836 = vmatprep.subr.bf16.mxu0 0
    %837 = vmatpush1.bf16.msra.mxu0 %v820
    %838 = vmatprep.subr.bf16.mxu0 0
    %839 = vmatpush1.bf16.msra.mxu0 %v821
    %840 = vmatprep.subr.bf16.mxu0 0
    %841 = vmatpush1.bf16.msra.mxu0 %v822
    %842 = vmatprep.subr.bf16.mxu0 0
    %843 = vmatpush1.bf16.msra.mxu0 %v823
    %844 = vmatprep.subr.bf16.mxu0 0
    %845 = vmatpush1.bf16.msra.mxu0 %v824
    %846 = vmatprep.subr.bf16.mxu0 0
    %847 = vmatpush1.bf16.msra.mxu0 %v825
    %848 = vmatprep.subr.bf16.mxu0 0
    %849 = vmatpush1.bf16.msra.mxu0 %v826
    %850 = vmatprep.subr.bf16.mxu0 0
    %851 = vmatpush1.bf16.msra.mxu0 %v827
    %852 = vmatprep.subr.bf16.mxu0 0
    %853 = vmatpush1.bf16.msra.mxu0 0
    %854 = vmatprep.subr.bf16.mxu0 0
    %855 = vmatpush1.bf16.msra.mxu0 0
    %856 = vmatprep.subr.bf16.mxu0 0
    %857 = vmatpush1.bf16.msra.mxu0 0
    %858 = vmatprep.subr.bf16.mxu0 0
    %859 = vmatpush1.bf16.msra.mxu0 0
    %860 = vmatprep.subr.bf16.mxu0 0
    %861 = vmatpush1.bf16.msra.mxu0 0
    %862 = vmatprep.subr.bf16.mxu0 0
    %863 = vmatpush1.bf16.msra.mxu0 0
    %864 = vmatprep.subr.bf16.mxu0 0
    %865 = vmatpush1.bf16.msra.mxu0 0
    %866 = vmatprep.subr.bf16.mxu0 0
    %867 = vmatpush1.bf16.msra.mxu0 0
    %868 = vmatprep.mubr.bf16.mxu0 0
    %869 = vmatmul.mubr.bf16.gmra.mrb[0].mxu0 %v767
    %v870 = vpop.f32.mrb[0].mxu0
    %v871 = vadd.f32 %v787, %v870
    %v872 = vpop.f32.mrb[0].mxu0
    %v873 = vpop.f32.mrb[0].mxu0
    %v874 = vadd.f32 %v787, %v873
    %v875 = vpop.f32.mrb[0].mxu0
    %876 = vdwg.mxu0
    %877 = vst [vmem:[#allocation8] sm:$0xff] %v871
    %878 = vst [vmem:[#allocation8 + $0x8] sm:$0xff] %v874
    // Predicated region
    $region30: #{tpu_custom_call.1} parent=1 // pred_check
      _
    $region31: #{tpu_custom_call.1} parent=1 // pred_check_branch
      %880 = sbr.rel (0) target = $region33
    $region32: #{tpu_custom_call.1} parent=1 // pred_region
      %s882 = ssub.s32 256, 256
      %883 = vsyncadd [#allocation4], %s882
      %s884 = sshll.u32 [#allocation8], 4
      %s885 = int_to_ptr.vmem [resolvable:$true] %s884
      %890 = dma.vmem_to_hbm [thread:$0]  %s885, 256, %s4, [#allocation4], 128, 128, 8
    $region33: #{tpu_custom_call.1} parent=1 // pred_fallthru
      _
    // Predicated region
    $region34: #{tpu_custom_call.1} parent=1 // pred_check
      _
    $region35: #{tpu_custom_call.1} parent=1 // pred_check_branch
      %892 = sbr.rel (0) target = $region37
    $region36: #{tpu_custom_call.1} parent=1 // pred_region
      %893 = dma.done [#allocation4], 256
    $region37: #{tpu_custom_call.1} parent=1 // pred_fallthru
      _
    %894 = vsyncpa [#allocation3], 1
    %895 = vsyncpa [#allocation6], 1
    %896 = vsyncpa [#allocation4], 1

</llo_original>
